<compile_context>
chip_gen: v7x
topology: tpu7x:2x2x1
jax: 0.10.0
libtpu: 0.0.40
codegen_flags: <defaults>
</compile_context>

<pallas_src>
import jax
import jax.numpy as jnp
from jax.experimental import pallas as pl
from jax.experimental.pallas import tpu as pltpu


def _lstm_d_kernel(x_ref, w_x_ref, b_ref, w_hh_f_ref, w_hh_b_ref,
                   w_fc_ref, b_fc_ref, out_ref):
    Bt, T, V = x_ref.shape
    H, H4 = w_hh_f_ref.shape          # (H, 4H) per direction
    H3 = 3 * H
    H8 = 2 * H4

    # --- fused input projection: embedding + gate inputs for BOTH directions
    # --- and all timesteps in ONE matmul (embedding + ih weights pre-folded,
    # --- ih/hh biases folded).  Kept as a value: a few KB, no scratch trip.
    x2d = x_ref[...].reshape(Bt * T, V)
    pre = jnp.dot(x2d, w_x_ref[...],
                  preferred_element_type=jnp.float32) + b_ref[...]
    pre = pre.reshape(Bt, T, H8)                               # (Bt, T, 8H)

    w_hh_f = w_hh_f_ref[...]                                   # hoisted once
    w_hh_b = w_hh_b_ref[...]

    def cell(gates, c):
        # gate columns packed (i, f, o, g): one sigmoid over 3H, one tanh on H
        sig = jax.nn.sigmoid(gates[:, :H3])
        g = jnp.tanh(gates[:, H3:])
        i = sig[:, :H]
        f = sig[:, H:2 * H]
        o = sig[:, 2 * H:H3]
        c_new = f * c + i * g
        h_new = o * jnp.tanh(c_new)
        return h_new, c_new

    h_f = jnp.zeros((Bt, H), jnp.float32)
    c_f = jnp.zeros((Bt, H), jnp.float32)
    h_b = jnp.zeros((Bt, H), jnp.float32)
    c_b = jnp.zeros((Bt, H), jnp.float32)

    # T is static and small -> fully static unroll with static time indices.
    # Two independent direction chains per step: the scheduler overlaps one
    # direction's MXU-pop latency with the other's EUP/VPU work.
    # (For large T, stage `pre` in a VMEM scratch and use a bounded-unroll
    #  fori_loop instead to keep vreg pressure in check.)
    for t in range(T):
        gates_f = pre[:, t, :H4] + jnp.dot(
            h_f, w_hh_f, preferred_element_type=jnp.float32)
        gates_b = pre[:, T - 1 - t, H4:] + jnp.dot(
            h_b, w_hh_b, preferred_element_type=jnp.float32)
        h_f, c_f = cell(gates_f, c_f)
        h_b, c_b = cell(gates_b, c_b)

    # cat([hidden, cell]) == [h_f | h_b | c_f | c_b] -> fc
    feat = jnp.concatenate([h_f, h_b, c_f, c_b], axis=1)       # (Bt, 4H)
    out_ref[...] = (jnp.dot(feat, w_fc_ref[...],
                            preferred_element_type=jnp.float32) + b_fc_ref[...])


def _pick_batch_tile(B):
    """>=2 evenly-dividing, multiple-of-8 tiles when the batch is large (so the
    'parallel' grid axis shards across v7x's TensorCores); else the full batch."""
    for bt in (256, 128, 64, 32, 16, 8):
        if B > bt and B % bt == 0:
            return bt
    return B


def lstm_d_forward(x_btv, kernel_params):
    """x_btv: (B, T, V) float32, batch-first like the PyTorch module."""
    w_x, b_ih, w_hh_f, w_hh_b, w_fc, b_fc = kernel_params
    B, T, V = x_btv.shape
    H4 = w_hh_f.shape[1]
    H8 = 2 * H4

    bt = _pick_batch_tile(B)
    n_bt = pl.cdiv(B, bt)

    # VMEM budget from the actual footprint: double-buffered x block + weights
    # (x2) + in-kernel pre value + output block; keep under v7x's 64 MiB.
    weight_bytes = sum(int(p.size) * 4 for p in kernel_params)
    footprint = (2 * bt * T * V * 4 + 2 * weight_bytes
                 + bt * T * H8 * 4 + 2 * bt * 2 * 4)
    vmem_limit = int(min(max(2 * footprint, 32 * 1024 * 1024),
                         56 * 1024 * 1024))

    grid_spec = pltpu.PrefetchScalarGridSpec(
        num_scalar_prefetch=0,
        grid=(n_bt,),
        in_specs=[
            pl.BlockSpec((bt, T, V), lambda i: (i, 0, 0)),   # x, batch-major
            pl.BlockSpec(w_x.shape, lambda i: (0, 0)),       # (V, 8H) fused emb+ih
            pl.BlockSpec(b_ih.shape, lambda i: (0, 0)),      # (1, 8H) folded biases
            pl.BlockSpec(w_hh_f.shape, lambda i: (0, 0)),    # (H, 4H) fwd
            pl.BlockSpec(w_hh_b.shape, lambda i: (0, 0)),    # (H, 4H) bwd
            pl.BlockSpec(w_fc.shape, lambda i: (0, 0)),      # (4H, 2)
            pl.BlockSpec(b_fc.shape, lambda i: (0, 0)),      # (1, 2)
        ],
        out_specs=pl.BlockSpec((bt, 2), lambda i: (i, 0)),
    )
    return pl.pallas_call(
        _lstm_d_kernel,
        out_shape=jax.ShapeDtypeStruct((B, 2), jnp.float32),
        grid_spec=grid_spec,
        compiler_params=pltpu.CompilerParams(
            dimension_semantics=("parallel",),
            vmem_limit_bytes=vmem_limit),
    )(x_btv, w_x, b_ih, w_hh_f, w_hh_b, w_fc, b_fc)


def init_params(key, vocab_size, embed_dim, hidden_size):
    """Deterministic uniform(-0.05, 0.05) init (the module's 'uniform' mode).

    Returns (kernel_params, raw_params):
      kernel_params: packed / pre-folded layouts consumed by the Pallas kernel.
      raw_params:    PyTorch-layout weights used by the pure-JAX reference.
    """
    V, E, H = vocab_size, embed_dim, hidden_size

    def uni(k, shape):
        return jax.random.uniform(k, shape, jnp.float32, -0.05, 0.05)

    ks = jax.random.split(key, 11)
    w_emb = uni(ks[0], (E, V))            # nn.Linear(V, E, bias=False).weight
    w_ih_f = uni(ks[1], (4 * H, E))       # LSTM weight_ih_l0, gate rows (i,f,g,o)
    w_hh_f = uni(ks[2], (4 * H, H))
    b_ih_f = uni(ks[3], (4 * H,))
    b_hh_f = uni(ks[4], (4 * H,))
    w_ih_b = uni(ks[5], (4 * H, E))       # *_reverse
    w_hh_b = uni(ks[6], (4 * H, H))
    b_ih_b = uni(ks[7], (4 * H,))
    b_hh_b = uni(ks[8], (4 * H,))
    w_fc = uni(ks[9], (2, 4 * H))         # nn.Linear(4H, 2).weight
    b_fc = uni(ks[10], (2,))

    raw = (w_emb, w_ih_f, w_hh_f, b_ih_f, b_hh_f,
           w_ih_b, w_hh_b, b_ih_b, b_hh_b, w_fc, b_fc)

    # --- kernel packing ---
    # 1) Reorder gate rows from PyTorch (i, f, g, o) to (i, f, o, g) so the
    #    three sigmoid gates form one contiguous 3H slice (tanh gets the rest).
    def regroup(w):                       # works for (4H, ...) and (4H,)
        i, f, g, o = jnp.split(w, 4, axis=0)
        return jnp.concatenate([i, f, o, g], axis=0)

    wi_f, wi_b = regroup(w_ih_f), regroup(w_ih_b)
    wh_f, wh_b = regroup(w_hh_f), regroup(w_hh_b)
    bb_f = regroup(b_ih_f + b_hh_f)
    bb_b = regroup(b_ih_b + b_hh_b)

    # 2) Fold the embedding into the input-gate projection (exact: no
    #    nonlinearity between them):  emb @ W_ih^T == x @ (W_ih @ W_emb)^T.
    #    Packed as one (V, 8H) weight: [forward 4H | backward 4H].
    w_x = jnp.concatenate([(wi_f @ w_emb).T, (wi_b @ w_emb).T], axis=1)  # (V, 8H)
    b_both = jnp.concatenate([bb_f, bb_b])[None, :]                      # (1, 8H)

    kernel_params = (w_x, b_both, wh_f.T, wh_b.T, w_fc.T, b_fc[None, :])
    return kernel_params, raw


def _reference_forward(x_btv, raw):
    """Pure-JAX reference using the raw PyTorch-layout weights."""
    (w_emb, w_ih_f, w_hh_f, b_ih_f, b_hh_f,
     w_ih_b, w_hh_b, b_ih_b, b_hh_b, w_fc, b_fc) = raw
    B, T, V = x_btv.shape
    H = w_hh_f.shape[1]
    emb = x_btv @ w_emb.T                                       # (B, T, E)

    def run(ts, wi, wh, bi, bh):
        h = jnp.zeros((B, H), jnp.float32)
        c = jnp.zeros((B, H), jnp.float32)
        for t in ts:
            gates = emb[:, t, :] @ wi.T + h @ wh.T + bi + bh
            i = jax.nn.sigmoid(gates[:, 0:H])
            f = jax.nn.sigmoid(gates[:, H:2 * H])
            g = jnp.tanh(gates[:, 2 * H:3 * H])
            o = jax.nn.sigmoid(gates[:, 3 * H:4 * H])
            c = f * c + i * g
            h = o * jnp.tanh(c)
        return h, c

    h_f, c_f = run(range(T), w_ih_f, w_hh_f, b_ih_f, b_hh_f)
    h_b, c_b = run(range(T - 1, -1, -1), w_ih_b, w_hh_b, b_ih_b, b_hh_b)
    feat = jnp.concatenate([h_f, h_b, c_f, c_b], axis=1)
    return feat @ w_fc.T + b_fc


if __name__ == "__main__":
    # Small shapes consistent with the module's forward.
    B, T = 2, 8                 # batch, max_seq_len
    V, E, H = 16, 32, 32        # vocab_size, embed_dim, hidden_size

    key = jax.random.PRNGKey(0)
    k_x, k_p = jax.random.split(key)
    x = jax.random.normal(k_x, (B, T, V), jnp.float32)
    kernel_params, raw_params = init_params(k_p, V, E, H)

    out = jax.block_until_ready(lstm_d_forward(x, kernel_params))
    ref = jax.block_until_ready(_reference_forward(x, raw_params))

    assert out.shape == (B, 2), out.shape
    assert jnp.allclose(out, ref, atol=1e-4, rtol=1e-4), (out, ref)
    print("KERNEL_OK")
</pallas_src>

<mosaic_0001>
module attributes {stable_mosaic.version = 11 : i64} {
  func.func @_lstm_d_kernel(%arg0: i32, %arg1: memref<2x8x16xf32, #tpu.memory_space<vmem>>, %arg2: memref<16x256xf32, #tpu.memory_space<vmem>>, %arg3: memref<1x256xf32, #tpu.memory_space<vmem>>, %arg4: memref<32x128xf32, #tpu.memory_space<vmem>>, %arg5: memref<32x128xf32, #tpu.memory_space<vmem>>, %arg6: memref<128x2xf32, #tpu.memory_space<vmem>>, %arg7: memref<1x2xf32, #tpu.memory_space<vmem>>, %arg8: memref<2x2xf32, #tpu.memory_space<vmem>>) attributes {dimension_semantics = [#tpu.dimension_semantics<parallel>], iteration_bounds = array<i64: 1>, scalar_prefetch = 0 : i64, scratch_operands = 0 : i64, tpu.core_type = #tpu.core_type<tc>, window_params = [{transform_indices = @transform_0, window_bounds = array<i64: 2, 8, 16>}, {pipeline_mode = #tpu.pipeline_mode<synchronous>, transform_indices = @transform_1, window_bounds = array<i64: 16, 256>}, {pipeline_mode = #tpu.pipeline_mode<synchronous>, transform_indices = @transform_2, window_bounds = array<i64: 1, 256>}, {pipeline_mode = #tpu.pipeline_mode<synchronous>, transform_indices = @transform_3, window_bounds = array<i64: 32, 128>}, {pipeline_mode = #tpu.pipeline_mode<synchronous>, transform_indices = @transform_4, window_bounds = array<i64: 32, 128>}, {pipeline_mode = #tpu.pipeline_mode<synchronous>, transform_indices = @transform_5, window_bounds = array<i64: 128, 2>}, {pipeline_mode = #tpu.pipeline_mode<synchronous>, transform_indices = @transform_6, window_bounds = array<i64: 1, 2>}, {transform_indices = @transform_7, window_bounds = array<i64: 2, 2>}]} {
    %c0 = arith.constant 0 : index
    %c0_0 = arith.constant 0 : index
    %c0_1 = arith.constant 0 : index
    %0 = vector.load %arg1[%c0, %c0_0, %c0_1] : memref<2x8x16xf32, #tpu.memory_space<vmem>>, vector<2x8x16xf32>
    %1 = vector.shape_cast %0 : vector<2x8x16xf32> to vector<16x16xf32>
    %c0_2 = arith.constant 0 : index
    %c0_3 = arith.constant 0 : index
    %2 = vector.load %arg2[%c0_2, %c0_3] : memref<16x256xf32, #tpu.memory_space<vmem>>, vector<16x256xf32>
    %cst = arith.constant dense<0.000000e+00> : vector<16x256xf32>
    %3 = tpu.matmul %1, %2, %cst {dimension_numbers = #tpu.dot_dimension_numbers<[1], [0], [0], [1], [0, 0, 1, 1], [], []>} : vector<16x16xf32>, vector<16x256xf32>, vector<16x256xf32> -> vector<16x256xf32>
    %c0_4 = arith.constant 0 : index
    %c0_5 = arith.constant 0 : index
    %4 = vector.load %arg3[%c0_4, %c0_5] : memref<1x256xf32, #tpu.memory_space<vmem>>, vector<1x256xf32>
    %5 = vector.broadcast %4 : vector<1x256xf32> to vector<16x256xf32>
    %6 = arith.addf %3, %5 : vector<16x256xf32>
    %7 = vector.shape_cast %6 : vector<16x256xf32> to vector<2x8x256xf32>
    %c0_6 = arith.constant 0 : index
    %c0_7 = arith.constant 0 : index
    %8 = vector.load %arg4[%c0_6, %c0_7] : memref<32x128xf32, #tpu.memory_space<vmem>>, vector<32x128xf32>
    %c0_8 = arith.constant 0 : index
    %c0_9 = arith.constant 0 : index
    %9 = vector.load %arg5[%c0_8, %c0_9] : memref<32x128xf32, #tpu.memory_space<vmem>>, vector<32x128xf32>
    %cst_10 = arith.constant 0.000000e+00 : f32
    %10 = vector.broadcast %cst_10 : f32 to vector<2x32xf32>
    %cst_11 = arith.constant 0.000000e+00 : f32
    %11 = vector.broadcast %cst_11 : f32 to vector<2x32xf32>
    %cst_12 = arith.constant 0.000000e+00 : f32
    %12 = vector.broadcast %cst_12 : f32 to vector<2x32xf32>
    %cst_13 = arith.constant 0.000000e+00 : f32
    %13 = vector.broadcast %cst_13 : f32 to vector<2x32xf32>
    %14 = vector.extract_strided_slice %7 {offsets = [0, 0, 0], sizes = [2, 1, 128], strides = [1, 1, 1]} : vector<2x8x256xf32> to vector<2x1x128xf32>
    %15 = vector.shape_cast %14 : vector<2x1x128xf32> to vector<2x128xf32>
    %cst_14 = arith.constant dense<0.000000e+00> : vector<2x128xf32>
    %16 = tpu.matmul %10, %8, %cst_14 {dimension_numbers = #tpu.dot_dimension_numbers<[1], [0], [0], [1], [0, 0, 1, 1], [], []>} : vector<2x32xf32>, vector<32x128xf32>, vector<2x128xf32> -> vector<2x128xf32>
    %17 = arith.addf %15, %16 : vector<2x128xf32>
    %18 = vector.extract_strided_slice %7 {offsets = [0, 7, 128], sizes = [2, 1, 128], strides = [1, 1, 1]} : vector<2x8x256xf32> to vector<2x1x128xf32>
    %19 = vector.shape_cast %18 : vector<2x1x128xf32> to vector<2x128xf32>
    %cst_15 = arith.constant dense<0.000000e+00> : vector<2x128xf32>
    %20 = tpu.matmul %12, %9, %cst_15 {dimension_numbers = #tpu.dot_dimension_numbers<[1], [0], [0], [1], [0, 0, 1, 1], [], []>} : vector<2x32xf32>, vector<32x128xf32>, vector<2x128xf32> -> vector<2x128xf32>
    %21 = arith.addf %19, %20 : vector<2x128xf32>
    %22 = vector.extract_strided_slice %17 {offsets = [0, 0], sizes = [2, 96], strides = [1, 1]} : vector<2x128xf32> to vector<2x96xf32>
    %23 = arith.negf %22 : vector<2x96xf32>
    %24 = math.exp %23 : vector<2x96xf32>
    %cst_16 = arith.constant 1.000000e+00 : f32
    %25 = vector.broadcast %cst_16 : f32 to vector<2x96xf32>
    %26 = arith.addf %25, %24 : vector<2x96xf32>
    %27 = arith.divf %25, %26 : vector<2x96xf32>
    %28 = vector.extract_strided_slice %17 {offsets = [0, 96], sizes = [2, 32], strides = [1, 1]} : vector<2x128xf32> to vector<2x32xf32>
    %29 = math.tanh %28 : vector<2x32xf32>
    %30 = vector.extract_strided_slice %27 {offsets = [0, 0], sizes = [2, 32], strides = [1, 1]} : vector<2x96xf32> to vector<2x32xf32>
    %31 = vector.extract_strided_slice %27 {offsets = [0, 32], sizes = [2, 32], strides = [1, 1]} : vector<2x96xf32> to vector<2x32xf32>
    %32 = vector.extract_strided_slice %27 {offsets = [0, 64], sizes = [2, 32], strides = [1, 1]} : vector<2x96xf32> to vector<2x32xf32>
    %33 = arith.mulf %31, %11 : vector<2x32xf32>
    %34 = arith.mulf %30, %29 : vector<2x32xf32>
    %35 = arith.addf %33, %34 : vector<2x32xf32>
    %36 = math.tanh %35 : vector<2x32xf32>
    %37 = arith.mulf %32, %36 : vector<2x32xf32>
    %38 = vector.extract_strided_slice %21 {offsets = [0, 0], sizes = [2, 96], strides = [1, 1]} : vector<2x128xf32> to vector<2x96xf32>
    %39 = arith.negf %38 : vector<2x96xf32>
    %40 = math.exp %39 : vector<2x96xf32>
    %cst_17 = arith.constant 1.000000e+00 : f32
    %41 = vector.broadcast %cst_17 : f32 to vector<2x96xf32>
    %42 = arith.addf %41, %40 : vector<2x96xf32>
    %43 = arith.divf %41, %42 : vector<2x96xf32>
    %44 = vector.extract_strided_slice %21 {offsets = [0, 96], sizes = [2, 32], strides = [1, 1]} : vector<2x128xf32> to vector<2x32xf32>
    %45 = math.tanh %44 : vector<2x32xf32>
    %46 = vector.extract_strided_slice %43 {offsets = [0, 0], sizes = [2, 32], strides = [1, 1]} : vector<2x96xf32> to vector<2x32xf32>
    %47 = vector.extract_strided_slice %43 {offsets = [0, 32], sizes = [2, 32], strides = [1, 1]} : vector<2x96xf32> to vector<2x32xf32>
    %48 = vector.extract_strided_slice %43 {offsets = [0, 64], sizes = [2, 32], strides = [1, 1]} : vector<2x96xf32> to vector<2x32xf32>
    %49 = arith.mulf %47, %13 : vector<2x32xf32>
    %50 = arith.mulf %46, %45 : vector<2x32xf32>
    %51 = arith.addf %49, %50 : vector<2x32xf32>
    %52 = math.tanh %51 : vector<2x32xf32>
    %53 = arith.mulf %48, %52 : vector<2x32xf32>
    %54 = vector.extract_strided_slice %7 {offsets = [0, 1, 0], sizes = [2, 1, 128], strides = [1, 1, 1]} : vector<2x8x256xf32> to vector<2x1x128xf32>
    %55 = vector.shape_cast %54 : vector<2x1x128xf32> to vector<2x128xf32>
    %cst_18 = arith.constant dense<0.000000e+00> : vector<2x128xf32>
    %56 = tpu.matmul %37, %8, %cst_18 {dimension_numbers = #tpu.dot_dimension_numbers<[1], [0], [0], [1], [0, 0, 1, 1], [], []>} : vector<2x32xf32>, vector<32x128xf32>, vector<2x128xf32> -> vector<2x128xf32>
    %57 = arith.addf %55, %56 : vector<2x128xf32>
    %58 = vector.extract_strided_slice %7 {offsets = [0, 6, 128], sizes = [2, 1, 128], strides = [1, 1, 1]} : vector<2x8x256xf32> to vector<2x1x128xf32>
    %59 = vector.shape_cast %58 : vector<2x1x128xf32> to vector<2x128xf32>
    %cst_19 = arith.constant dense<0.000000e+00> : vector<2x128xf32>
    %60 = tpu.matmul %53, %9, %cst_19 {dimension_numbers = #tpu.dot_dimension_numbers<[1], [0], [0], [1], [0, 0, 1, 1], [], []>} : vector<2x32xf32>, vector<32x128xf32>, vector<2x128xf32> -> vector<2x128xf32>
    %61 = arith.addf %59, %60 : vector<2x128xf32>
    %62 = vector.extract_strided_slice %57 {offsets = [0, 0], sizes = [2, 96], strides = [1, 1]} : vector<2x128xf32> to vector<2x96xf32>
    %63 = arith.negf %62 : vector<2x96xf32>
    %64 = math.exp %63 : vector<2x96xf32>
    %cst_20 = arith.constant 1.000000e+00 : f32
    %65 = vector.broadcast %cst_20 : f32 to vector<2x96xf32>
    %66 = arith.addf %65, %64 : vector<2x96xf32>
    %67 = arith.divf %65, %66 : vector<2x96xf32>
    %68 = vector.extract_strided_slice %57 {offsets = [0, 96], sizes = [2, 32], strides = [1, 1]} : vector<2x128xf32> to vector<2x32xf32>
    %69 = math.tanh %68 : vector<2x32xf32>
    %70 = vector.extract_strided_slice %67 {offsets = [0, 0], sizes = [2, 32], strides = [1, 1]} : vector<2x96xf32> to vector<2x32xf32>
    %71 = vector.extract_strided_slice %67 {offsets = [0, 32], sizes = [2, 32], strides = [1, 1]} : vector<2x96xf32> to vector<2x32xf32>
    %72 = vector.extract_strided_slice %67 {offsets = [0, 64], sizes = [2, 32], strides = [1, 1]} : vector<2x96xf32> to vector<2x32xf32>
    %73 = arith.mulf %71, %35 : vector<2x32xf32>
    %74 = arith.mulf %70, %69 : vector<2x32xf32>
    %75 = arith.addf %73, %74 : vector<2x32xf32>
    %76 = math.tanh %75 : vector<2x32xf32>
    %77 = arith.mulf %72, %76 : vector<2x32xf32>
    %78 = vector.extract_strided_slice %61 {offsets = [0, 0], sizes = [2, 96], strides = [1, 1]} : vector<2x128xf32> to vector<2x96xf32>
    %79 = arith.negf %78 : vector<2x96xf32>
    %80 = math.exp %79 : vector<2x96xf32>
    %cst_21 = arith.constant 1.000000e+00 : f32
    %81 = vector.broadcast %cst_21 : f32 to vector<2x96xf32>
    %82 = arith.addf %81, %80 : vector<2x96xf32>
    %83 = arith.divf %81, %82 : vector<2x96xf32>
    %84 = vector.extract_strided_slice %61 {offsets = [0, 96], sizes = [2, 32], strides = [1, 1]} : vector<2x128xf32> to vector<2x32xf32>
    %85 = math.tanh %84 : vector<2x32xf32>
    %86 = vector.extract_strided_slice %83 {offsets = [0, 0], sizes = [2, 32], strides = [1, 1]} : vector<2x96xf32> to vector<2x32xf32>
    %87 = vector.extract_strided_slice %83 {offsets = [0, 32], sizes = [2, 32], strides = [1, 1]} : vector<2x96xf32> to vector<2x32xf32>
    %88 = vector.extract_strided_slice %83 {offsets = [0, 64], sizes = [2, 32], strides = [1, 1]} : vector<2x96xf32> to vector<2x32xf32>
    %89 = arith.mulf %87, %51 : vector<2x32xf32>
    %90 = arith.mulf %86, %85 : vector<2x32xf32>
    %91 = arith.addf %89, %90 : vector<2x32xf32>
    %92 = math.tanh %91 : vector<2x32xf32>
    %93 = arith.mulf %88, %92 : vector<2x32xf32>
    %94 = vector.extract_strided_slice %7 {offsets = [0, 2, 0], sizes = [2, 1, 128], strides = [1, 1, 1]} : vector<2x8x256xf32> to vector<2x1x128xf32>
    %95 = vector.shape_cast %94 : vector<2x1x128xf32> to vector<2x128xf32>
    %cst_22 = arith.constant dense<0.000000e+00> : vector<2x128xf32>
    %96 = tpu.matmul %77, %8, %cst_22 {dimension_numbers = #tpu.dot_dimension_numbers<[1], [0], [0], [1], [0, 0, 1, 1], [], []>} : vector<2x32xf32>, vector<32x128xf32>, vector<2x128xf32> -> vector<2x128xf32>
    %97 = arith.addf %95, %96 : vector<2x128xf32>
    %98 = vector.extract_strided_slice %7 {offsets = [0, 5, 128], sizes = [2, 1, 128], strides = [1, 1, 1]} : vector<2x8x256xf32> to vector<2x1x128xf32>
    %99 = vector.shape_cast %98 : vector<2x1x128xf32> to vector<2x128xf32>
    %cst_23 = arith.constant dense<0.000000e+00> : vector<2x128xf32>
    %100 = tpu.matmul %93, %9, %cst_23 {dimension_numbers = #tpu.dot_dimension_numbers<[1], [0], [0], [1], [0, 0, 1, 1], [], []>} : vector<2x32xf32>, vector<32x128xf32>, vector<2x128xf32> -> vector<2x128xf32>
    %101 = arith.addf %99, %100 : vector<2x128xf32>
    %102 = vector.extract_strided_slice %97 {offsets = [0, 0], sizes = [2, 96], strides = [1, 1]} : vector<2x128xf32> to vector<2x96xf32>
    %103 = arith.negf %102 : vector<2x96xf32>
    %104 = math.exp %103 : vector<2x96xf32>
    %cst_24 = arith.constant 1.000000e+00 : f32
    %105 = vector.broadcast %cst_24 : f32 to vector<2x96xf32>
    %106 = arith.addf %105, %104 : vector<2x96xf32>
    %107 = arith.divf %105, %106 : vector<2x96xf32>
    %108 = vector.extract_strided_slice %97 {offsets = [0, 96], sizes = [2, 32], strides = [1, 1]} : vector<2x128xf32> to vector<2x32xf32>
    %109 = math.tanh %108 : vector<2x32xf32>
    %110 = vector.extract_strided_slice %107 {offsets = [0, 0], sizes = [2, 32], strides = [1, 1]} : vector<2x96xf32> to vector<2x32xf32>
    %111 = vector.extract_strided_slice %107 {offsets = [0, 32], sizes = [2, 32], strides = [1, 1]} : vector<2x96xf32> to vector<2x32xf32>
    %112 = vector.extract_strided_slice %107 {offsets = [0, 64], sizes = [2, 32], strides = [1, 1]} : vector<2x96xf32> to vector<2x32xf32>
    %113 = arith.mulf %111, %75 : vector<2x32xf32>
    %114 = arith.mulf %110, %109 : vector<2x32xf32>
    %115 = arith.addf %113, %114 : vector<2x32xf32>
    %116 = math.tanh %115 : vector<2x32xf32>
    %117 = arith.mulf %112, %116 : vector<2x32xf32>
    %118 = vector.extract_strided_slice %101 {offsets = [0, 0], sizes = [2, 96], strides = [1, 1]} : vector<2x128xf32> to vector<2x96xf32>
    %119 = arith.negf %118 : vector<2x96xf32>
    %120 = math.exp %119 : vector<2x96xf32>
    %cst_25 = arith.constant 1.000000e+00 : f32
    %121 = vector.broadcast %cst_25 : f32 to vector<2x96xf32>
    %122 = arith.addf %121, %120 : vector<2x96xf32>
    %123 = arith.divf %121, %122 : vector<2x96xf32>
    %124 = vector.extract_strided_slice %101 {offsets = [0, 96], sizes = [2, 32], strides = [1, 1]} : vector<2x128xf32> to vector<2x32xf32>
    %125 = math.tanh %124 : vector<2x32xf32>
    %126 = vector.extract_strided_slice %123 {offsets = [0, 0], sizes = [2, 32], strides = [1, 1]} : vector<2x96xf32> to vector<2x32xf32>
    %127 = vector.extract_strided_slice %123 {offsets = [0, 32], sizes = [2, 32], strides = [1, 1]} : vector<2x96xf32> to vector<2x32xf32>
    %128 = vector.extract_strided_slice %123 {offsets = [0, 64], sizes = [2, 32], strides = [1, 1]} : vector<2x96xf32> to vector<2x32xf32>
    %129 = arith.mulf %127, %91 : vector<2x32xf32>
    %130 = arith.mulf %126, %125 : vector<2x32xf32>
    %131 = arith.addf %129, %130 : vector<2x32xf32>
    %132 = math.tanh %131 : vector<2x32xf32>
    %133 = arith.mulf %128, %132 : vector<2x32xf32>
    %134 = vector.extract_strided_slice %7 {offsets = [0, 3, 0], sizes = [2, 1, 128], strides = [1, 1, 1]} : vector<2x8x256xf32> to vector<2x1x128xf32>
    %135 = vector.shape_cast %134 : vector<2x1x128xf32> to vector<2x128xf32>
    %cst_26 = arith.constant dense<0.000000e+00> : vector<2x128xf32>
    %136 = tpu.matmul %117, %8, %cst_26 {dimension_numbers = #tpu.dot_dimension_numbers<[1], [0], [0], [1], [0, 0, 1, 1], [], []>} : vector<2x32xf32>, vector<32x128xf32>, vector<2x128xf32> -> vector<2x128xf32>
    %137 = arith.addf %135, %136 : vector<2x128xf32>
    %138 = vector.extract_strided_slice %7 {offsets = [0, 4, 128], sizes = [2, 1, 128], strides = [1, 1, 1]} : vector<2x8x256xf32> to vector<2x1x128xf32>
    %139 = vector.shape_cast %138 : vector<2x1x128xf32> to vector<2x128xf32>
    %cst_27 = arith.constant dense<0.000000e+00> : vector<2x128xf32>
    %140 = tpu.matmul %133, %9, %cst_27 {dimension_numbers = #tpu.dot_dimension_numbers<[1], [0], [0], [1], [0, 0, 1, 1], [], []>} : vector<2x32xf32>, vector<32x128xf32>, vector<2x128xf32> -> vector<2x128xf32>
    %141 = arith.addf %139, %140 : vector<2x128xf32>
    %142 = vector.extract_strided_slice %137 {offsets = [0, 0], sizes = [2, 96], strides = [1, 1]} : vector<2x128xf32> to vector<2x96xf32>
    %143 = arith.negf %142 : vector<2x96xf32>
    %144 = math.exp %143 : vector<2x96xf32>
    %cst_28 = arith.constant 1.000000e+00 : f32
    %145 = vector.broadcast %cst_28 : f32 to vector<2x96xf32>
    %146 = arith.addf %145, %144 : vector<2x96xf32>
    %147 = arith.divf %145, %146 : vector<2x96xf32>
    %148 = vector.extract_strided_slice %137 {offsets = [0, 96], sizes = [2, 32], strides = [1, 1]} : vector<2x128xf32> to vector<2x32xf32>
    %149 = math.tanh %148 : vector<2x32xf32>
    %150 = vector.extract_strided_slice %147 {offsets = [0, 0], sizes = [2, 32], strides = [1, 1]} : vector<2x96xf32> to vector<2x32xf32>
    %151 = vector.extract_strided_slice %147 {offsets = [0, 32], sizes = [2, 32], strides = [1, 1]} : vector<2x96xf32> to vector<2x32xf32>
    %152 = vector.extract_strided_slice %147 {offsets = [0, 64], sizes = [2, 32], strides = [1, 1]} : vector<2x96xf32> to vector<2x32xf32>
    %153 = arith.mulf %151, %115 : vector<2x32xf32>
    %154 = arith.mulf %150, %149 : vector<2x32xf32>
    %155 = arith.addf %153, %154 : vector<2x32xf32>
    %156 = math.tanh %155 : vector<2x32xf32>
    %157 = arith.mulf %152, %156 : vector<2x32xf32>
    %158 = vector.extract_strided_slice %141 {offsets = [0, 0], sizes = [2, 96], strides = [1, 1]} : vector<2x128xf32> to vector<2x96xf32>
    %159 = arith.negf %158 : vector<2x96xf32>
    %160 = math.exp %159 : vector<2x96xf32>
    %cst_29 = arith.constant 1.000000e+00 : f32
    %161 = vector.broadcast %cst_29 : f32 to vector<2x96xf32>
    %162 = arith.addf %161, %160 : vector<2x96xf32>
    %163 = arith.divf %161, %162 : vector<2x96xf32>
    %164 = vector.extract_strided_slice %141 {offsets = [0, 96], sizes = [2, 32], strides = [1, 1]} : vector<2x128xf32> to vector<2x32xf32>
    %165 = math.tanh %164 : vector<2x32xf32>
    %166 = vector.extract_strided_slice %163 {offsets = [0, 0], sizes = [2, 32], strides = [1, 1]} : vector<2x96xf32> to vector<2x32xf32>
    %167 = vector.extract_strided_slice %163 {offsets = [0, 32], sizes = [2, 32], strides = [1, 1]} : vector<2x96xf32> to vector<2x32xf32>
    %168 = vector.extract_strided_slice %163 {offsets = [0, 64], sizes = [2, 32], strides = [1, 1]} : vector<2x96xf32> to vector<2x32xf32>
    %169 = arith.mulf %167, %131 : vector<2x32xf32>
    %170 = arith.mulf %166, %165 : vector<2x32xf32>
    %171 = arith.addf %169, %170 : vector<2x32xf32>
    %172 = math.tanh %171 : vector<2x32xf32>
    %173 = arith.mulf %168, %172 : vector<2x32xf32>
    %174 = vector.extract_strided_slice %7 {offsets = [0, 4, 0], sizes = [2, 1, 128], strides = [1, 1, 1]} : vector<2x8x256xf32> to vector<2x1x128xf32>
    %175 = vector.shape_cast %174 : vector<2x1x128xf32> to vector<2x128xf32>
    %cst_30 = arith.constant dense<0.000000e+00> : vector<2x128xf32>
    %176 = tpu.matmul %157, %8, %cst_30 {dimension_numbers = #tpu.dot_dimension_numbers<[1], [0], [0], [1], [0, 0, 1, 1], [], []>} : vector<2x32xf32>, vector<32x128xf32>, vector<2x128xf32> -> vector<2x128xf32>
    %177 = arith.addf %175, %176 : vector<2x128xf32>
    %178 = vector.extract_strided_slice %7 {offsets = [0, 3, 128], sizes = [2, 1, 128], strides = [1, 1, 1]} : vector<2x8x256xf32> to vector<2x1x128xf32>
    %179 = vector.shape_cast %178 : vector<2x1x128xf32> to vector<2x128xf32>
    %cst_31 = arith.constant dense<0.000000e+00> : vector<2x128xf32>
    %180 = tpu.matmul %173, %9, %cst_31 {dimension_numbers = #tpu.dot_dimension_numbers<[1], [0], [0], [1], [0, 0, 1, 1], [], []>} : vector<2x32xf32>, vector<32x128xf32>, vector<2x128xf32> -> vector<2x128xf32>
    %181 = arith.addf %179, %180 : vector<2x128xf32>
    %182 = vector.extract_strided_slice %177 {offsets = [0, 0], sizes = [2, 96], strides = [1, 1]} : vector<2x128xf32> to vector<2x96xf32>
    %183 = arith.negf %182 : vector<2x96xf32>
    %184 = math.exp %183 : vector<2x96xf32>
    %cst_32 = arith.constant 1.000000e+00 : f32
    %185 = vector.broadcast %cst_32 : f32 to vector<2x96xf32>
    %186 = arith.addf %185, %184 : vector<2x96xf32>
    %187 = arith.divf %185, %186 : vector<2x96xf32>
    %188 = vector.extract_strided_slice %177 {offsets = [0, 96], sizes = [2, 32], strides = [1, 1]} : vector<2x128xf32> to vector<2x32xf32>
    %189 = math.tanh %188 : vector<2x32xf32>
    %190 = vector.extract_strided_slice %187 {offsets = [0, 0], sizes = [2, 32], strides = [1, 1]} : vector<2x96xf32> to vector<2x32xf32>
    %191 = vector.extract_strided_slice %187 {offsets = [0, 32], sizes = [2, 32], strides = [1, 1]} : vector<2x96xf32> to vector<2x32xf32>
    %192 = vector.extract_strided_slice %187 {offsets = [0, 64], sizes = [2, 32], strides = [1, 1]} : vector<2x96xf32> to vector<2x32xf32>
    %193 = arith.mulf %191, %155 : vector<2x32xf32>
    %194 = arith.mulf %190, %189 : vector<2x32xf32>
    %195 = arith.addf %193, %194 : vector<2x32xf32>
    %196 = math.tanh %195 : vector<2x32xf32>
    %197 = arith.mulf %192, %196 : vector<2x32xf32>
    %198 = vector.extract_strided_slice %181 {offsets = [0, 0], sizes = [2, 96], strides = [1, 1]} : vector<2x128xf32> to vector<2x96xf32>
    %199 = arith.negf %198 : vector<2x96xf32>
    %200 = math.exp %199 : vector<2x96xf32>
    %cst_33 = arith.constant 1.000000e+00 : f32
    %201 = vector.broadcast %cst_33 : f32 to vector<2x96xf32>
    %202 = arith.addf %201, %200 : vector<2x96xf32>
    %203 = arith.divf %201, %202 : vector<2x96xf32>
    %204 = vector.extract_strided_slice %181 {offsets = [0, 96], sizes = [2, 32], strides = [1, 1]} : vector<2x128xf32> to vector<2x32xf32>
    %205 = math.tanh %204 : vector<2x32xf32>
    %206 = vector.extract_strided_slice %203 {offsets = [0, 0], sizes = [2, 32], strides = [1, 1]} : vector<2x96xf32> to vector<2x32xf32>
    %207 = vector.extract_strided_slice %203 {offsets = [0, 32], sizes = [2, 32], strides = [1, 1]} : vector<2x96xf32> to vector<2x32xf32>
    %208 = vector.extract_strided_slice %203 {offsets = [0, 64], sizes = [2, 32], strides = [1, 1]} : vector<2x96xf32> to vector<2x32xf32>
    %209 = arith.mulf %207, %171 : vector<2x32xf32>
    %210 = arith.mulf %206, %205 : vector<2x32xf32>
    %211 = arith.addf %209, %210 : vector<2x32xf32>
    %212 = math.tanh %211 : vector<2x32xf32>
    %213 = arith.mulf %208, %212 : vector<2x32xf32>
    %214 = vector.extract_strided_slice %7 {offsets = [0, 5, 0], sizes = [2, 1, 128], strides = [1, 1, 1]} : vector<2x8x256xf32> to vector<2x1x128xf32>
    %215 = vector.shape_cast %214 : vector<2x1x128xf32> to vector<2x128xf32>
    %cst_34 = arith.constant dense<0.000000e+00> : vector<2x128xf32>
    %216 = tpu.matmul %197, %8, %cst_34 {dimension_numbers = #tpu.dot_dimension_numbers<[1], [0], [0], [1], [0, 0, 1, 1], [], []>} : vector<2x32xf32>, vector<32x128xf32>, vector<2x128xf32> -> vector<2x128xf32>
    %217 = arith.addf %215, %216 : vector<2x128xf32>
    %218 = vector.extract_strided_slice %7 {offsets = [0, 2, 128], sizes = [2, 1, 128], strides = [1, 1, 1]} : vector<2x8x256xf32> to vector<2x1x128xf32>
    %219 = vector.shape_cast %218 : vector<2x1x128xf32> to vector<2x128xf32>
    %cst_35 = arith.constant dense<0.000000e+00> : vector<2x128xf32>
    %220 = tpu.matmul %213, %9, %cst_35 {dimension_numbers = #tpu.dot_dimension_numbers<[1], [0], [0], [1], [0, 0, 1, 1], [], []>} : vector<2x32xf32>, vector<32x128xf32>, vector<2x128xf32> -> vector<2x128xf32>
    %221 = arith.addf %219, %220 : vector<2x128xf32>
    %222 = vector.extract_strided_slice %217 {offsets = [0, 0], sizes = [2, 96], strides = [1, 1]} : vector<2x128xf32> to vector<2x96xf32>
    %223 = arith.negf %222 : vector<2x96xf32>
    %224 = math.exp %223 : vector<2x96xf32>
    %cst_36 = arith.constant 1.000000e+00 : f32
    %225 = vector.broadcast %cst_36 : f32 to vector<2x96xf32>
    %226 = arith.addf %225, %224 : vector<2x96xf32>
    %227 = arith.divf %225, %226 : vector<2x96xf32>
    %228 = vector.extract_strided_slice %217 {offsets = [0, 96], sizes = [2, 32], strides = [1, 1]} : vector<2x128xf32> to vector<2x32xf32>
    %229 = math.tanh %228 : vector<2x32xf32>
    %230 = vector.extract_strided_slice %227 {offsets = [0, 0], sizes = [2, 32], strides = [1, 1]} : vector<2x96xf32> to vector<2x32xf32>
    %231 = vector.extract_strided_slice %227 {offsets = [0, 32], sizes = [2, 32], strides = [1, 1]} : vector<2x96xf32> to vector<2x32xf32>
    %232 = vector.extract_strided_slice %227 {offsets = [0, 64], sizes = [2, 32], strides = [1, 1]} : vector<2x96xf32> to vector<2x32xf32>
    %233 = arith.mulf %231, %195 : vector<2x32xf32>
    %234 = arith.mulf %230, %229 : vector<2x32xf32>
    %235 = arith.addf %233, %234 : vector<2x32xf32>
    %236 = math.tanh %235 : vector<2x32xf32>
    %237 = arith.mulf %232, %236 : vector<2x32xf32>
    %238 = vector.extract_strided_slice %221 {offsets = [0, 0], sizes = [2, 96], strides = [1, 1]} : vector<2x128xf32> to vector<2x96xf32>
    %239 = arith.negf %238 : vector<2x96xf32>
    %240 = math.exp %239 : vector<2x96xf32>
    %cst_37 = arith.constant 1.000000e+00 : f32
    %241 = vector.broadcast %cst_37 : f32 to vector<2x96xf32>
    %242 = arith.addf %241, %240 : vector<2x96xf32>
    %243 = arith.divf %241, %242 : vector<2x96xf32>
    %244 = vector.extract_strided_slice %221 {offsets = [0, 96], sizes = [2, 32], strides = [1, 1]} : vector<2x128xf32> to vector<2x32xf32>
    %245 = math.tanh %244 : vector<2x32xf32>
    %246 = vector.extract_strided_slice %243 {offsets = [0, 0], sizes = [2, 32], strides = [1, 1]} : vector<2x96xf32> to vector<2x32xf32>
    %247 = vector.extract_strided_slice %243 {offsets = [0, 32], sizes = [2, 32], strides = [1, 1]} : vector<2x96xf32> to vector<2x32xf32>
    %248 = vector.extract_strided_slice %243 {offsets = [0, 64], sizes = [2, 32], strides = [1, 1]} : vector<2x96xf32> to vector<2x32xf32>
    %249 = arith.mulf %247, %211 : vector<2x32xf32>
    %250 = arith.mulf %246, %245 : vector<2x32xf32>
    %251 = arith.addf %249, %250 : vector<2x32xf32>
    %252 = math.tanh %251 : vector<2x32xf32>
    %253 = arith.mulf %248, %252 : vector<2x32xf32>
    %254 = vector.extract_strided_slice %7 {offsets = [0, 6, 0], sizes = [2, 1, 128], strides = [1, 1, 1]} : vector<2x8x256xf32> to vector<2x1x128xf32>
    %255 = vector.shape_cast %254 : vector<2x1x128xf32> to vector<2x128xf32>
    %cst_38 = arith.constant dense<0.000000e+00> : vector<2x128xf32>
    %256 = tpu.matmul %237, %8, %cst_38 {dimension_numbers = #tpu.dot_dimension_numbers<[1], [0], [0], [1], [0, 0, 1, 1], [], []>} : vector<2x32xf32>, vector<32x128xf32>, vector<2x128xf32> -> vector<2x128xf32>
    %257 = arith.addf %255, %256 : vector<2x128xf32>
    %258 = vector.extract_strided_slice %7 {offsets = [0, 1, 128], sizes = [2, 1, 128], strides = [1, 1, 1]} : vector<2x8x256xf32> to vector<2x1x128xf32>
    %259 = vector.shape_cast %258 : vector<2x1x128xf32> to vector<2x128xf32>
    %cst_39 = arith.constant dense<0.000000e+00> : vector<2x128xf32>
    %260 = tpu.matmul %253, %9, %cst_39 {dimension_numbers = #tpu.dot_dimension_numbers<[1], [0], [0], [1], [0, 0, 1, 1], [], []>} : vector<2x32xf32>, vector<32x128xf32>, vector<2x128xf32> -> vector<2x128xf32>
    %261 = arith.addf %259, %260 : vector<2x128xf32>
    %262 = vector.extract_strided_slice %257 {offsets = [0, 0], sizes = [2, 96], strides = [1, 1]} : vector<2x128xf32> to vector<2x96xf32>
    %263 = arith.negf %262 : vector<2x96xf32>
    %264 = math.exp %263 : vector<2x96xf32>
    %cst_40 = arith.constant 1.000000e+00 : f32
    %265 = vector.broadcast %cst_40 : f32 to vector<2x96xf32>
    %266 = arith.addf %265, %264 : vector<2x96xf32>
    %267 = arith.divf %265, %266 : vector<2x96xf32>
    %268 = vector.extract_strided_slice %257 {offsets = [0, 96], sizes = [2, 32], strides = [1, 1]} : vector<2x128xf32> to vector<2x32xf32>
    %269 = math.tanh %268 : vector<2x32xf32>
    %270 = vector.extract_strided_slice %267 {offsets = [0, 0], sizes = [2, 32], strides = [1, 1]} : vector<2x96xf32> to vector<2x32xf32>
    %271 = vector.extract_strided_slice %267 {offsets = [0, 32], sizes = [2, 32], strides = [1, 1]} : vector<2x96xf32> to vector<2x32xf32>
    %272 = vector.extract_strided_slice %267 {offsets = [0, 64], sizes = [2, 32], strides = [1, 1]} : vector<2x96xf32> to vector<2x32xf32>
    %273 = arith.mulf %271, %235 : vector<2x32xf32>
    %274 = arith.mulf %270, %269 : vector<2x32xf32>
    %275 = arith.addf %273, %274 : vector<2x32xf32>
    %276 = math.tanh %275 : vector<2x32xf32>
    %277 = arith.mulf %272, %276 : vector<2x32xf32>
    %278 = vector.extract_strided_slice %261 {offsets = [0, 0], sizes = [2, 96], strides = [1, 1]} : vector<2x128xf32> to vector<2x96xf32>
    %279 = arith.negf %278 : vector<2x96xf32>
    %280 = math.exp %279 : vector<2x96xf32>
    %cst_41 = arith.constant 1.000000e+00 : f32
    %281 = vector.broadcast %cst_41 : f32 to vector<2x96xf32>
    %282 = arith.addf %281, %280 : vector<2x96xf32>
    %283 = arith.divf %281, %282 : vector<2x96xf32>
    %284 = vector.extract_strided_slice %261 {offsets = [0, 96], sizes = [2, 32], strides = [1, 1]} : vector<2x128xf32> to vector<2x32xf32>
    %285 = math.tanh %284 : vector<2x32xf32>
    %286 = vector.extract_strided_slice %283 {offsets = [0, 0], sizes = [2, 32], strides = [1, 1]} : vector<2x96xf32> to vector<2x32xf32>
    %287 = vector.extract_strided_slice %283 {offsets = [0, 32], sizes = [2, 32], strides = [1, 1]} : vector<2x96xf32> to vector<2x32xf32>
    %288 = vector.extract_strided_slice %283 {offsets = [0, 64], sizes = [2, 32], strides = [1, 1]} : vector<2x96xf32> to vector<2x32xf32>
    %289 = arith.mulf %287, %251 : vector<2x32xf32>
    %290 = arith.mulf %286, %285 : vector<2x32xf32>
    %291 = arith.addf %289, %290 : vector<2x32xf32>
    %292 = math.tanh %291 : vector<2x32xf32>
    %293 = arith.mulf %288, %292 : vector<2x32xf32>
    %294 = vector.extract_strided_slice %7 {offsets = [0, 7, 0], sizes = [2, 1, 128], strides = [1, 1, 1]} : vector<2x8x256xf32> to vector<2x1x128xf32>
    %295 = vector.shape_cast %294 : vector<2x1x128xf32> to vector<2x128xf32>
    %cst_42 = arith.constant dense<0.000000e+00> : vector<2x128xf32>
    %296 = tpu.matmul %277, %8, %cst_42 {dimension_numbers = #tpu.dot_dimension_numbers<[1], [0], [0], [1], [0, 0, 1, 1], [], []>} : vector<2x32xf32>, vector<32x128xf32>, vector<2x128xf32> -> vector<2x128xf32>
    %297 = arith.addf %295, %296 : vector<2x128xf32>
    %298 = vector.extract_strided_slice %7 {offsets = [0, 0, 128], sizes = [2, 1, 128], strides = [1, 1, 1]} : vector<2x8x256xf32> to vector<2x1x128xf32>
    %299 = vector.shape_cast %298 : vector<2x1x128xf32> to vector<2x128xf32>
    %cst_43 = arith.constant dense<0.000000e+00> : vector<2x128xf32>
    %300 = tpu.matmul %293, %9, %cst_43 {dimension_numbers = #tpu.dot_dimension_numbers<[1], [0], [0], [1], [0, 0, 1, 1], [], []>} : vector<2x32xf32>, vector<32x128xf32>, vector<2x128xf32> -> vector<2x128xf32>
    %301 = arith.addf %299, %300 : vector<2x128xf32>
    %302 = vector.extract_strided_slice %297 {offsets = [0, 0], sizes = [2, 96], strides = [1, 1]} : vector<2x128xf32> to vector<2x96xf32>
    %303 = arith.negf %302 : vector<2x96xf32>
    %304 = math.exp %303 : vector<2x96xf32>
    %cst_44 = arith.constant 1.000000e+00 : f32
    %305 = vector.broadcast %cst_44 : f32 to vector<2x96xf32>
    %306 = arith.addf %305, %304 : vector<2x96xf32>
    %307 = arith.divf %305, %306 : vector<2x96xf32>
    %308 = vector.extract_strided_slice %297 {offsets = [0, 96], sizes = [2, 32], strides = [1, 1]} : vector<2x128xf32> to vector<2x32xf32>
    %309 = math.tanh %308 : vector<2x32xf32>
    %310 = vector.extract_strided_slice %307 {offsets = [0, 0], sizes = [2, 32], strides = [1, 1]} : vector<2x96xf32> to vector<2x32xf32>
    %311 = vector.extract_strided_slice %307 {offsets = [0, 32], sizes = [2, 32], strides = [1, 1]} : vector<2x96xf32> to vector<2x32xf32>
    %312 = vector.extract_strided_slice %307 {offsets = [0, 64], sizes = [2, 32], strides = [1, 1]} : vector<2x96xf32> to vector<2x32xf32>
    %313 = arith.mulf %311, %275 : vector<2x32xf32>
    %314 = arith.mulf %310, %309 : vector<2x32xf32>
    %315 = arith.addf %313, %314 : vector<2x32xf32>
    %316 = math.tanh %315 : vector<2x32xf32>
    %317 = arith.mulf %312, %316 : vector<2x32xf32>
    %318 = vector.extract_strided_slice %301 {offsets = [0, 0], sizes = [2, 96], strides = [1, 1]} : vector<2x128xf32> to vector<2x96xf32>
    %319 = arith.negf %318 : vector<2x96xf32>
    %320 = math.exp %319 : vector<2x96xf32>
    %cst_45 = arith.constant 1.000000e+00 : f32
    %321 = vector.broadcast %cst_45 : f32 to vector<2x96xf32>
    %322 = arith.addf %321, %320 : vector<2x96xf32>
    %323 = arith.divf %321, %322 : vector<2x96xf32>
    %324 = vector.extract_strided_slice %301 {offsets = [0, 96], sizes = [2, 32], strides = [1, 1]} : vector<2x128xf32> to vector<2x32xf32>
    %325 = math.tanh %324 : vector<2x32xf32>
    %326 = vector.extract_strided_slice %323 {offsets = [0, 0], sizes = [2, 32], strides = [1, 1]} : vector<2x96xf32> to vector<2x32xf32>
    %327 = vector.extract_strided_slice %323 {offsets = [0, 32], sizes = [2, 32], strides = [1, 1]} : vector<2x96xf32> to vector<2x32xf32>
    %328 = vector.extract_strided_slice %323 {offsets = [0, 64], sizes = [2, 32], strides = [1, 1]} : vector<2x96xf32> to vector<2x32xf32>
    %329 = arith.mulf %327, %291 : vector<2x32xf32>
    %330 = arith.mulf %326, %325 : vector<2x32xf32>
    %331 = arith.addf %329, %330 : vector<2x32xf32>
    %332 = math.tanh %331 : vector<2x32xf32>
    %333 = arith.mulf %328, %332 : vector<2x32xf32>
    %334 = tpu.concatenate %317, %333, %315, %331 in 1 : vector<2x32xf32>, vector<2x32xf32>, vector<2x32xf32>, vector<2x32xf32> -> vector<2x128xf32>
    %c0_46 = arith.constant 0 : index
    %c0_47 = arith.constant 0 : index
    %335 = vector.load %arg6[%c0_46, %c0_47] : memref<128x2xf32, #tpu.memory_space<vmem>>, vector<128x2xf32>
    %cst_48 = arith.constant dense<0.000000e+00> : vector<2x2xf32>
    %336 = tpu.matmul %334, %335, %cst_48 {dimension_numbers = #tpu.dot_dimension_numbers<[1], [0], [0], [1], [0, 0, 1, 1], [], []>} : vector<2x128xf32>, vector<128x2xf32>, vector<2x2xf32> -> vector<2x2xf32>
    %c0_49 = arith.constant 0 : index
    %c0_50 = arith.constant 0 : index
    %337 = vector.load %arg7[%c0_49, %c0_50] : memref<1x2xf32, #tpu.memory_space<vmem>>, vector<1x2xf32>
    %338 = vector.broadcast %337 : vector<1x2xf32> to vector<2x2xf32>
    %339 = arith.addf %336, %338 : vector<2x2xf32>
    %c0_51 = arith.constant 0 : index
    %c0_52 = arith.constant 0 : index
    %340 = vector.load %arg8[%c0_51, %c0_52] : memref<2x2xf32, #tpu.memory_space<vmem>>, vector<2x2xf32>
    tpu.vector_store %arg8[%c0_51, %c0_52], %339 {strides = array<i32>} : memref<2x2xf32, #tpu.memory_space<vmem>>, vector<2x2xf32>,
    return
  }
  func.func @transform_0(%arg0: i32) -> (i32, i32, i32) {
    %c0_i32 = arith.constant 0 : i32
    %c0_i32_0 = arith.constant 0 : i32
    %c0_i32_1 = arith.constant 0 : i32
    return %arg0, %c0_i32, %c0_i32_0 : i32, i32, i32
  }
  func.func @transform_1(%arg0: i32) -> (i32, i32) {
    %c0_i32 = arith.constant 0 : i32
    %c0_i32_0 = arith.constant 0 : i32
    %c0_i32_1 = arith.constant 0 : i32
    return %c0_i32, %c0_i32_0 : i32, i32
  }
  func.func @transform_2(%arg0: i32) -> (i32, i32) {
    %c0_i32 = arith.constant 0 : i32
    %c0_i32_0 = arith.constant 0 : i32
    %c0_i32_1 = arith.constant 0 : i32
    return %c0_i32, %c0_i32_0 : i32, i32
  }
  func.func @transform_3(%arg0: i32) -> (i32, i32) {
    %c0_i32 = arith.constant 0 : i32
    %c0_i32_0 = arith.constant 0 : i32
    %c0_i32_1 = arith.constant 0 : i32
    return %c0_i32, %c0_i32_0 : i32, i32
  }
  func.func @transform_4(%arg0: i32) -> (i32, i32) {
    %c0_i32 = arith.constant 0 : i32
    %c0_i32_0 = arith.constant 0 : i32
    %c0_i32_1 = arith.constant 0 : i32
    return %c0_i32, %c0_i32_0 : i32, i32
  }
  func.func @transform_5(%arg0: i32) -> (i32, i32) {
    %c0_i32 = arith.constant 0 : i32
    %c0_i32_0 = arith.constant 0 : i32
    %c0_i32_1 = arith.constant 0 : i32
    return %c0_i32, %c0_i32_0 : i32, i32
  }
  func.func @transform_6(%arg0: i32) -> (i32, i32) {
    %c0_i32 = arith.constant 0 : i32
    %c0_i32_0 = arith.constant 0 : i32
    %c0_i32_1 = arith.constant 0 : i32
    return %c0_i32, %c0_i32_0 : i32, i32
  }
  func.func @transform_7(%arg0: i32) -> (i32, i32) {
    %c0_i32 = arith.constant 0 : i32
    %c0_i32_0 = arith.constant 0 : i32
    return %arg0, %c0_i32 : i32, i32
  }
}

</mosaic_0001>

<llo_original>
// kernel: tpu_custom_call.1
$region0: #{tpu_custom_call.1}
  #allocation0 [shape = 'u32[]', space=smem, size = 0x4, offset = 0x4, fixed_abs, tag = 'smem constant byte address 0x4 - core index']
  #allocation1 [shape = 'u32[144,128]{1,0:T(1,128)}', space=vmem, size = 0x12000, scoped, tag = 'internal scratch']
  %s0 = inlined_call_operand.vmem [shape: f32[2,8,16], index: 0, kind: input, shape index: {}]
  %s1 = inlined_call_operand.vmem [shape: f32[16,256], index: 1, kind: input, shape index: {}]
  %s2 = inlined_call_operand.vmem [shape: f32[1,256], index: 2, kind: input, shape index: {}]
  %s3 = inlined_call_operand.vmem [shape: f32[32,128], index: 3, kind: input, shape index: {}]
  %s4 = inlined_call_operand.vmem [shape: f32[32,128], index: 4, kind: input, shape index: {}]
  %s5 = inlined_call_operand.vmem [shape: f32[128,2], index: 5, kind: input, shape index: {}]
  %s6 = inlined_call_operand.vmem [shape: f32[1,2], index: 6, kind: input, shape index: {}]
  %s7 = inlined_call_operand.hbm [shape: f32[2,2], index: 7, kind: output, shape index: {}]
  %s8 = sld [smem:[#allocation0]]
  $region38: #{tpu_custom_call.1} parent=0
    _
  %s10 = ssub.s32 1, %s8
  %s11 = scalar_select 0, %s10, %s8
  $region1: #{tpu_custom_call.1} parent=0
    #allocation2 [shape = 'u8[1024]{0}', space=vmem, size = 0x400, scoped, tag = 'output window, operand 0, single buffered']
    #allocation3 [shape = 's32[1]{0}', space=sflag, size = 0x4, scoped, tag = 'scoped memory for tpu_custom_call.1']
    %12 = vsyncpa [#allocation3], 0
    // Predicated region
    $region2: #{tpu_custom_call.1} parent=1 // pred_check
      _
    $region3: #{tpu_custom_call.1} parent=1 // pred_check_branch
      %14 = sbr.rel (0) target = $region5
    $region4: #{tpu_custom_call.1} parent=1 // pred_region
      _
    $region5: #{tpu_custom_call.1} parent=1 // pred_fallthru
      _
    // Predicated region
    $region6: #{tpu_custom_call.1} parent=1 // pred_check
      _
    $region7: #{tpu_custom_call.1} parent=1 // pred_check_branch
      %16 = sbr.rel (0) target = $region9
    $region8: #{tpu_custom_call.1} parent=1 // pred_region
      _
    $region9: #{tpu_custom_call.1} parent=1 // pred_fallthru
      _
    // Predicated region
    $region10: #{tpu_custom_call.1} parent=1 // pred_check
      _
    $region11: #{tpu_custom_call.1} parent=1 // pred_check_branch
      %18 = sbr.rel (0) target = $region13
    $region12: #{tpu_custom_call.1} parent=1 // pred_region
      _
    $region13: #{tpu_custom_call.1} parent=1 // pred_fallthru
      _
    // Predicated region
    $region14: #{tpu_custom_call.1} parent=1 // pred_check
      _
    $region15: #{tpu_custom_call.1} parent=1 // pred_check_branch
      %20 = sbr.rel (0) target = $region17
    $region16: #{tpu_custom_call.1} parent=1 // pred_region
      _
    $region17: #{tpu_custom_call.1} parent=1 // pred_fallthru
      _
    // Predicated region
    $region18: #{tpu_custom_call.1} parent=1 // pred_check
      _
    $region19: #{tpu_custom_call.1} parent=1 // pred_check_branch
      %22 = sbr.rel (0) target = $region21
    $region20: #{tpu_custom_call.1} parent=1 // pred_region
      _
    $region21: #{tpu_custom_call.1} parent=1 // pred_fallthru
      _
    // Predicated region
    $region22: #{tpu_custom_call.1} parent=1 // pred_check
      _
    $region23: #{tpu_custom_call.1} parent=1 // pred_check_branch
      %24 = sbr.rel (0) target = $region25
    $region24: #{tpu_custom_call.1} parent=1 // pred_region
      _
    $region25: #{tpu_custom_call.1} parent=1 // pred_fallthru
      _
    // Predicated region
    $region26: #{tpu_custom_call.1} parent=1 // pred_check
      _
    $region27: #{tpu_custom_call.1} parent=1 // pred_check_branch
      %26 = sbr.rel (0) target = $region29
    $region28: #{tpu_custom_call.1} parent=1 // pred_region
      _
    $region29: #{tpu_custom_call.1} parent=1 // pred_fallthru
      _
    %v27 = vld [vmem:[%s0] sm:$0xff]
    %v28 = vld [vmem:[%s0 + $0x8] sm:$0xff]
    %v29 = vld [vmem:[%s1] sm:$0xff]
    %v30 = vld [vmem:[%s1 + $0x8] sm:$0xff]
    %v31 = vld [vmem:[%s1 + $0x10] sm:$0xff]
    %v32 = vld [vmem:[%s1 + $0x18] sm:$0xff]
    %v33 = vld [vmem:[%s2] sm:$0x3]
    %v35 = vlaneseq
    %v36 = vshrl.u32 %v35, 7
    %v37 = vsub.s32 0, %v36
    %v38 = vrot.slane %v33, %v37
    %v39 = vlaneseq
    %v40 = vshrl.u32 %v39, 7
    %v41 = vsub.s32 1, %v40
    %v42 = vrot.slane %v33, %v41
    %vm45 = vcmask 130048
    %v47 = vsel %vm45, %v27, 0
    %v50 = vsel %vm45, %v28, 0
    %52 = vmatprep.subr.mxu0 %v30
    %53 = vmatpush1.msra.mxu0 %v29
    %54 = vmatprep.subr.mxu0 %v32
    %55 = vmatpush1.msra.mxu0 %v31
    %56 = vmatprep.subr.mxu0 0.0
    %57 = vmatpush1.msra.mxu0 0.0
    %58 = vmatprep.subr.mxu0 0.0
    %59 = vmatpush1.msra.mxu0 0.0
    %60 = vmatprep.subr.mxu0 0.0
    %61 = vmatpush1.msra.mxu0 0.0
    %62 = vmatprep.subr.mxu0 0.0
    %63 = vmatpush1.msra.mxu0 0.0
    %64 = vmatprep.subr.mxu0 0.0
    %65 = vmatpush1.msra.mxu0 0.0
    %66 = vmatprep.subr.mxu0 0.0
    %67 = vmatpush1.msra.mxu0 0.0
    %68 = vmatprep.subr.mxu0 0.0
    %69 = vmatpush1.msra.mxu0 0.0
    %70 = vmatprep.subr.mxu0 0.0
    %71 = vmatpush1.msra.mxu0 0.0
    %72 = vmatprep.subr.mxu0 0.0
    %73 = vmatpush1.msra.mxu0 0.0
    %74 = vmatprep.subr.mxu0 0.0
    %75 = vmatpush1.msra.mxu0 0.0
    %76 = vmatprep.subr.mxu0 0.0
    %77 = vmatpush1.msra.mxu0 0.0
    %78 = vmatprep.subr.mxu0 0.0
    %79 = vmatpush1.msra.mxu0 0.0
    %80 = vmatprep.subr.mxu0 0.0
    %81 = vmatpush1.msra.mxu0 0.0
    %82 = vmatprep.subr.mxu0 0.0
    %83 = vmatpush1.msra.mxu0 0.0
    %84 = vmatprep.subr.mxu0 0.0
    %85 = vmatpush1.msra.mxu0 0.0
    %86 = vmatprep.subr.mxu0 0.0
    %87 = vmatpush1.msra.mxu0 0.0
    %88 = vmatprep.subr.mxu0 0.0
    %89 = vmatpush1.msra.mxu0 0.0
    %90 = vmatprep.subr.mxu0 0.0
    %91 = vmatpush1.msra.mxu0 0.0
    %92 = vmatprep.subr.mxu0 0.0
    %93 = vmatpush1.msra.mxu0 0.0
    %94 = vmatprep.subr.mxu0 0.0
    %95 = vmatpush1.msra.mxu0 0.0
    %96 = vmatprep.subr.mxu0 0.0
    %97 = vmatpush1.msra.mxu0 0.0
    %98 = vmatprep.subr.mxu0 0.0
    %99 = vmatpush1.msra.mxu0 0.0
    %100 = vmatprep.subr.mxu0 0.0
    %101 = vmatpush1.msra.mxu0 0.0
    %102 = vmatprep.subr.mxu0 0.0
    %103 = vmatpush1.msra.mxu0 0.0
    %104 = vmatprep.subr.mxu0 0.0
    %105 = vmatpush1.msra.mxu0 0.0
    %106 = vmatprep.subr.mxu0 0.0
    %107 = vmatpush1.msra.mxu0 0.0
    %108 = vmatprep.subr.mxu0 0.0
    %109 = vmatpush1.msra.mxu0 0.0
    %110 = vmatprep.subr.mxu0 0.0
    %111 = vmatpush1.msra.mxu0 0.0
    %112 = vmatprep.subr.mxu0 0.0
    %113 = vmatpush1.msra.mxu0 0.0
    %114 = vmatprep.subr.mxu0 0.0
    %115 = vmatpush1.msra.mxu0 0.0
    %116 = vmatprep.mubr.f32.mxu0 0.0
    %117 = vmatmul.mubr.f32.gmra.mrb[0].mxu0 %v47
    %v118 = vpop.f32.mrb[0].mxu0
    %v119 = vadd.f32 %v38, %v118
    %v120 = vpop.f32.mrb[0].mxu0
    %v121 = vadd.f32 %v42, %v120
    %122 = vmatprep.mubr.f32.mxu0 0.0
    %123 = vmatmul.mubr.f32.gmra.mrb[0].mxu0 %v50
    %v124 = vpop.f32.mrb[0].mxu0
    %v125 = vadd.f32 %v38, %v124
    %v126 = vpop.f32.mrb[0].mxu0
    %v127 = vadd.f32 %v42, %v126
    %128 = vdwg.mxu0
    %v129 = vld [vmem:[%s3] sm:$0xff]
    %v130 = vld [vmem:[%s3 + $0x8] sm:$0xff]
    %v131 = vld [vmem:[%s3 + $0x10] sm:$0xff]
    %v132 = vld [vmem:[%s3 + $0x18] sm:$0xff]
    %v133 = vld [vmem:[%s4] sm:$0xff]
    %v134 = vld [vmem:[%s4 + $0x8] sm:$0xff]
    %v135 = vld [vmem:[%s4 + $0x10] sm:$0xff]
    %v136 = vld [vmem:[%s4 + $0x18] sm:$0xff]
    %vm137 = vcmask 261120
    %v139 = vsel %vm137, 0.0, 0
    %141 = vmatprep.subr.mxu0 0.0
    %142 = vmatpush1.msra.mxu0 %v129
    %143 = vmatprep.subr.mxu0 0.0
    %144 = vmatpush1.msra.mxu0 %v130
    %145 = vmatprep.subr.mxu0 0.0
    %146 = vmatpush1.msra.mxu0 %v131
    %147 = vmatprep.subr.mxu0 0.0
    %148 = vmatpush1.msra.mxu0 %v132
    %149 = vmatprep.subr.mxu0 0.0
    %150 = vmatpush1.msra.mxu0 0.0
    %151 = vmatprep.subr.mxu0 0.0
    %152 = vmatpush1.msra.mxu0 0.0
    %153 = vmatprep.subr.mxu0 0.0
    %154 = vmatpush1.msra.mxu0 0.0
    %155 = vmatprep.subr.mxu0 0.0
    %156 = vmatpush1.msra.mxu0 0.0
    %157 = vmatprep.subr.mxu0 0.0
    %158 = vmatpush1.msra.mxu0 0.0
    %159 = vmatprep.subr.mxu0 0.0
    %160 = vmatpush1.msra.mxu0 0.0
    %161 = vmatprep.subr.mxu0 0.0
    %162 = vmatpush1.msra.mxu0 0.0
    %163 = vmatprep.subr.mxu0 0.0
    %164 = vmatpush1.msra.mxu0 0.0
    %165 = vmatprep.subr.mxu0 0.0
    %166 = vmatpush1.msra.mxu0 0.0
    %167 = vmatprep.subr.mxu0 0.0
    %168 = vmatpush1.msra.mxu0 0.0
    %169 = vmatprep.subr.mxu0 0.0
    %170 = vmatpush1.msra.mxu0 0.0
    %171 = vmatprep.subr.mxu0 0.0
    %172 = vmatpush1.msra.mxu0 0.0
    %173 = vmatprep.subr.mxu0 0.0
    %174 = vmatpush1.msra.mxu0 0.0
    %175 = vmatprep.subr.mxu0 0.0
    %176 = vmatpush1.msra.mxu0 0.0
    %177 = vmatprep.subr.mxu0 0.0
    %178 = vmatpush1.msra.mxu0 0.0
    %179 = vmatprep.subr.mxu0 0.0
    %180 = vmatpush1.msra.mxu0 0.0
    %181 = vmatprep.subr.mxu0 0.0
    %182 = vmatpush1.msra.mxu0 0.0
    %183 = vmatprep.subr.mxu0 0.0
    %184 = vmatpush1.msra.mxu0 0.0
    %185 = vmatprep.subr.mxu0 0.0
    %186 = vmatpush1.msra.mxu0 0.0
    %187 = vmatprep.subr.mxu0 0.0
    %188 = vmatpush1.msra.mxu0 0.0
    %189 = vmatprep.subr.mxu0 0.0
    %190 = vmatpush1.msra.mxu0 0.0
    %191 = vmatprep.subr.mxu0 0.0
    %192 = vmatpush1.msra.mxu0 0.0
    %193 = vmatprep.subr.mxu0 0.0
    %194 = vmatpush1.msra.mxu0 0.0
    %195 = vmatprep.subr.mxu0 0.0
    %196 = vmatpush1.msra.mxu0 0.0
    %197 = vmatprep.subr.mxu0 0.0
    %198 = vmatpush1.msra.mxu0 0.0
    %199 = vmatprep.subr.mxu0 0.0
    %200 = vmatpush1.msra.mxu0 0.0
    %201 = vmatprep.subr.mxu0 0.0
    %202 = vmatpush1.msra.mxu0 0.0
    %203 = vmatprep.subr.mxu0 0.0
    %204 = vmatpush1.msra.mxu0 0.0
    %205 = vmatprep.mubr.f32.mxu0 0.0
    %206 = vmatmul.mubr.f32.gmra.mrb[0].mxu0 %v139
    %v207 = vpop.f32.mrb[0].mxu0
    %v208 = vadd.f32 0.0, %v207
    %v209 = vpop.f32.mrb[0].mxu0
    %210 = vdwg.mxu0
    %v212 = vrot.slane %v208, 1
    %v215 = vadd.f32 %v119, %v208
    %v216 = vadd.f32 %v125, %v212
    %217 = vmatprep.subr.mxu0 0.0
    %218 = vmatpush1.msra.mxu0 %v133
    %219 = vmatprep.subr.mxu0 0.0
    %220 = vmatpush1.msra.mxu0 %v134
    %221 = vmatprep.subr.mxu0 0.0
    %222 = vmatpush1.msra.mxu0 %v135
    %223 = vmatprep.subr.mxu0 0.0
    %224 = vmatpush1.msra.mxu0 %v136
    %225 = vmatprep.subr.mxu0 0.0
    %226 = vmatpush1.msra.mxu0 0.0
    %227 = vmatprep.subr.mxu0 0.0
    %228 = vmatpush1.msra.mxu0 0.0
    %229 = vmatprep.subr.mxu0 0.0
    %230 = vmatpush1.msra.mxu0 0.0
    %231 = vmatprep.subr.mxu0 0.0
    %232 = vmatpush1.msra.mxu0 0.0
    %233 = vmatprep.subr.mxu0 0.0
    %234 = vmatpush1.msra.mxu0 0.0
    %235 = vmatprep.subr.mxu0 0.0
    %236 = vmatpush1.msra.mxu0 0.0
    %237 = vmatprep.subr.mxu0 0.0
    %238 = vmatpush1.msra.mxu0 0.0
    %239 = vmatprep.subr.mxu0 0.0
    %240 = vmatpush1.msra.mxu0 0.0
    %241 = vmatprep.subr.mxu0 0.0
    %242 = vmatpush1.msra.mxu0 0.0
    %243 = vmatprep.subr.mxu0 0.0
    %244 = vmatpush1.msra.mxu0 0.0
    %245 = vmatprep.subr.mxu0 0.0
    %246 = vmatpush1.msra.mxu0 0.0
    %247 = vmatprep.subr.mxu0 0.0
    %248 = vmatpush1.msra.mxu0 0.0
    %249 = vmatprep.subr.mxu0 0.0
    %250 = vmatpush1.msra.mxu0 0.0
    %251 = vmatprep.subr.mxu0 0.0
    %252 = vmatpush1.msra.mxu0 0.0
    %253 = vmatprep.subr.mxu0 0.0
    %254 = vmatpush1.msra.mxu0 0.0
    %255 = vmatprep.subr.mxu0 0.0
    %256 = vmatpush1.msra.mxu0 0.0
    %257 = vmatprep.subr.mxu0 0.0
    %258 = vmatpush1.msra.mxu0 0.0
    %259 = vmatprep.subr.mxu0 0.0
    %260 = vmatpush1.msra.mxu0 0.0
    %261 = vmatprep.subr.mxu0 0.0
    %262 = vmatpush1.msra.mxu0 0.0
    %263 = vmatprep.subr.mxu0 0.0
    %264 = vmatpush1.msra.mxu0 0.0
    %265 = vmatprep.subr.mxu0 0.0
    %266 = vmatpush1.msra.mxu0 0.0
    %267 = vmatprep.subr.mxu0 0.0
    %268 = vmatpush1.msra.mxu0 0.0
    %269 = vmatprep.subr.mxu0 0.0
    %270 = vmatpush1.msra.mxu0 0.0
    %271 = vmatprep.subr.mxu0 0.0
    %272 = vmatpush1.msra.mxu0 0.0
    %273 = vmatprep.subr.mxu0 0.0
    %274 = vmatpush1.msra.mxu0 0.0
    %275 = vmatprep.subr.mxu0 0.0
    %276 = vmatpush1.msra.mxu0 0.0
    %277 = vmatprep.subr.mxu0 0.0
    %278 = vmatpush1.msra.mxu0 0.0
    %279 = vmatprep.subr.mxu0 0.0
    %280 = vmatpush1.msra.mxu0 0.0
    %281 = vmatprep.mubr.f32.mxu0 0.0
    %282 = vmatmul.mubr.f32.gmra.mrb[0].mxu0 %v139
    %v283 = vpop.f32.mrb[0].mxu0
    %v284 = vadd.f32 0.0, %v283
    %v285 = vpop.f32.mrb[0].mxu0
    %286 = vdwg.mxu0
    %v288 = vrot.slane %v284, 1
    %v289 = vrot.slane %v284, 2
    %v292 = vadd.f32 %v121, %v288
    %v293 = vadd.f32 %v127, %v289
    %v294 = vxor.u32 %v215, 2147483648
    %v295 = vxor.u32 %v216, 2147483648
    %v296 = vmul.f32 %v294, 1.442695
    %v297 = vpow.pop %v296
    %v298 = vmul.f32 %v295, 1.442695
    %v299 = vpow.pop %v298
    %v300 = vadd.f32 %v297, 1.0
    %v301 = vadd.f32 %v299, 1.0
    %v302 = vrcp.pop %v300
    %v303 = vmul.f32 1.0, %v302
    %v304 = vrcp.pop %v301
    %v305 = vmul.f32 1.0, %v304
    %v306 = vtanh.pop %v215
    %v307 = vtanh.pop %v216
    %v308 = vmul.f32 %v303, 0.0
    %v309 = vmul.f32 %v305, 0.0
    %312 = vrot.lane.b32.xlu0 %v306, 32
    %v313 = vpop.permute.xlu0 %312
    %314 = vrot.lane.b32.xlu0 %v307, 32
    %v315 = vpop.permute.xlu0 %314
    %v318 = vmul.f32 %v303, %v313
    %v319 = vmul.f32 %v305, %v315
    %322 = vrot.lane.b32.xlu0 %v318, 32
    %v323 = vpop.permute.xlu0 %322
    %324 = vrot.lane.b32.xlu0 %v319, 32
    %v325 = vpop.permute.xlu0 %324
    %v328 = vadd.f32 %v308, %v323
    %v329 = vadd.f32 %v309, %v325
    %v330 = vtanh.pop %v328
    %v331 = vtanh.pop %v329
    %334 = vrot.lane.b32.xlu0 %v330, 32
    %v335 = vpop.permute.xlu0 %334
    %336 = vrot.lane.b32.xlu0 %v331, 32
    %v337 = vpop.permute.xlu0 %336
    %v340 = vmul.f32 %v303, %v335
    %v341 = vmul.f32 %v305, %v337
    %v342 = vxor.u32 %v292, 2147483648
    %v343 = vxor.u32 %v293, 2147483648
    %v344 = vmul.f32 %v342, 1.442695
    %v345 = vpow.pop %v344
    %v346 = vmul.f32 %v343, 1.442695
    %v347 = vpow.pop %v346
    %v348 = vadd.f32 %v345, 1.0
    %v349 = vadd.f32 %v347, 1.0
    %v350 = vrcp.pop %v348
    %v351 = vmul.f32 1.0, %v350
    %v352 = vrcp.pop %v349
    %v353 = vmul.f32 1.0, %v352
    %v354 = vtanh.pop %v292
    %v355 = vtanh.pop %v293
    %v356 = vmul.f32 %v351, 0.0
    %v357 = vmul.f32 %v353, 0.0
    %360 = vrot.lane.b32.xlu0 %v354, 32
    %v361 = vpop.permute.xlu0 %360
    %362 = vrot.lane.b32.xlu0 %v355, 32
    %v363 = vpop.permute.xlu0 %362
    %v366 = vmul.f32 %v351, %v361
    %v367 = vmul.f32 %v353, %v363
    %370 = vrot.lane.b32.xlu0 %v366, 32
    %v371 = vpop.permute.xlu0 %370
    %372 = vrot.lane.b32.xlu0 %v367, 32
    %v373 = vpop.permute.xlu0 %372
    %v376 = vadd.f32 %v356, %v371
    %v377 = vadd.f32 %v357, %v373
    %v378 = vtanh.pop %v376
    %v379 = vtanh.pop %v377
    %382 = vrot.lane.b32.xlu0 %v378, 32
    %v383 = vpop.permute.xlu0 %382
    %384 = vrot.lane.b32.xlu0 %v379, 32
    %v385 = vpop.permute.xlu0 %384
    %v388 = vmul.f32 %v351, %v383
    %v389 = vmul.f32 %v353, %v385
    %v392 = vrot.slane %v341, 7
    %vm393 = vcmask 1041409
    %v394 = vsel %vm393, %v392, %v340
    %395 = vrot.lane.b32.xlu0 %v394, 64
    %v396 = vpop.permute.xlu0 %395
    %v397 = vsel %vm137, %v396, 0
    %399 = vmatprep.subr.mxu0 0.0
    %400 = vmatpush1.msra.mxu0 %v129
    %401 = vmatprep.subr.mxu0 0.0
    %402 = vmatpush1.msra.mxu0 %v130
    %403 = vmatprep.subr.mxu0 0.0
    %404 = vmatpush1.msra.mxu0 %v131
    %405 = vmatprep.subr.mxu0 0.0
    %406 = vmatpush1.msra.mxu0 %v132
    %407 = vmatprep.subr.mxu0 0.0
    %408 = vmatpush1.msra.mxu0 0.0
    %409 = vmatprep.subr.mxu0 0.0
    %410 = vmatpush1.msra.mxu0 0.0
    %411 = vmatprep.subr.mxu0 0.0
    %412 = vmatpush1.msra.mxu0 0.0
    %413 = vmatprep.subr.mxu0 0.0
    %414 = vmatpush1.msra.mxu0 0.0
    %415 = vmatprep.subr.mxu0 0.0
    %416 = vmatpush1.msra.mxu0 0.0
    %417 = vmatprep.subr.mxu0 0.0
    %418 = vmatpush1.msra.mxu0 0.0
    %419 = vmatprep.subr.mxu0 0.0
    %420 = vmatpush1.msra.mxu0 0.0
    %421 = vmatprep.subr.mxu0 0.0
    %422 = vmatpush1.msra.mxu0 0.0
    %423 = vmatprep.subr.mxu0 0.0
    %424 = vmatpush1.msra.mxu0 0.0
    %425 = vmatprep.subr.mxu0 0.0
    %426 = vmatpush1.msra.mxu0 0.0
    %427 = vmatprep.subr.mxu0 0.0
    %428 = vmatpush1.msra.mxu0 0.0
    %429 = vmatprep.subr.mxu0 0.0
    %430 = vmatpush1.msra.mxu0 0.0
    %431 = vmatprep.subr.mxu0 0.0
    %432 = vmatpush1.msra.mxu0 0.0
    %433 = vmatprep.subr.mxu0 0.0
    %434 = vmatpush1.msra.mxu0 0.0
    %435 = vmatprep.subr.mxu0 0.0
    %436 = vmatpush1.msra.mxu0 0.0
    %437 = vmatprep.subr.mxu0 0.0
    %438 = vmatpush1.msra.mxu0 0.0
    %439 = vmatprep.subr.mxu0 0.0
    %440 = vmatpush1.msra.mxu0 0.0
    %441 = vmatprep.subr.mxu0 0.0
    %442 = vmatpush1.msra.mxu0 0.0
    %443 = vmatprep.subr.mxu0 0.0
    %444 = vmatpush1.msra.mxu0 0.0
    %445 = vmatprep.subr.mxu0 0.0
    %446 = vmatpush1.msra.mxu0 0.0
    %447 = vmatprep.subr.mxu0 0.0
    %448 = vmatpush1.msra.mxu0 0.0
    %449 = vmatprep.subr.mxu0 0.0
    %450 = vmatpush1.msra.mxu0 0.0
    %451 = vmatprep.subr.mxu0 0.0
    %452 = vmatpush1.msra.mxu0 0.0
    %453 = vmatprep.subr.mxu0 0.0
    %454 = vmatpush1.msra.mxu0 0.0
    %455 = vmatprep.subr.mxu0 0.0
    %456 = vmatpush1.msra.mxu0 0.0
    %457 = vmatprep.subr.mxu0 0.0
    %458 = vmatpush1.msra.mxu0 0.0
    %459 = vmatprep.subr.mxu0 0.0
    %460 = vmatpush1.msra.mxu0 0.0
    %461 = vmatprep.subr.mxu0 0.0
    %462 = vmatpush1.msra.mxu0 0.0
    %463 = vmatprep.mubr.f32.mxu0 0.0
    %464 = vmatmul.mubr.f32.gmra.mrb[0].mxu0 %v397
    %v465 = vpop.f32.mrb[0].mxu0
    %v466 = vadd.f32 0.0, %v465
    %v467 = vpop.f32.mrb[0].mxu0
    %468 = vdwg.mxu0
    %v470 = vrot.slane %v466, 7
    %v473 = vadd.f32 %v119, %v470
    %v474 = vadd.f32 %v125, %v466
    %v477 = vrot.slane %v388, 7
    %v478 = vrot.slane %v389, 6
    %v479 = vsel %vm393, %v478, %v477
    %480 = vrot.lane.b32.xlu0 %v479, 64
    %v481 = vpop.permute.xlu0 %480
    %v482 = vsel %vm137, %v481, 0
    %484 = vmatprep.subr.mxu0 0.0
    %485 = vmatpush1.msra.mxu0 %v133
    %486 = vmatprep.subr.mxu0 0.0
    %487 = vmatpush1.msra.mxu0 %v134
    %488 = vmatprep.subr.mxu0 0.0
    %489 = vmatpush1.msra.mxu0 %v135
    %490 = vmatprep.subr.mxu0 0.0
    %491 = vmatpush1.msra.mxu0 %v136
    %492 = vmatprep.subr.mxu0 0.0
    %493 = vmatpush1.msra.mxu0 0.0
    %494 = vmatprep.subr.mxu0 0.0
    %495 = vmatpush1.msra.mxu0 0.0
    %496 = vmatprep.subr.mxu0 0.0
    %497 = vmatpush1.msra.mxu0 0.0
    %498 = vmatprep.subr.mxu0 0.0
    %499 = vmatpush1.msra.mxu0 0.0
    %500 = vmatprep.subr.mxu0 0.0
    %501 = vmatpush1.msra.mxu0 0.0
    %502 = vmatprep.subr.mxu0 0.0
    %503 = vmatpush1.msra.mxu0 0.0
    %504 = vmatprep.subr.mxu0 0.0
    %505 = vmatpush1.msra.mxu0 0.0
    %506 = vmatprep.subr.mxu0 0.0
    %507 = vmatpush1.msra.mxu0 0.0
    %508 = vmatprep.subr.mxu0 0.0
    %509 = vmatpush1.msra.mxu0 0.0
    %510 = vmatprep.subr.mxu0 0.0
    %511 = vmatpush1.msra.mxu0 0.0
    %512 = vmatprep.subr.mxu0 0.0
    %513 = vmatpush1.msra.mxu0 0.0
    %514 = vmatprep.subr.mxu0 0.0
    %515 = vmatpush1.msra.mxu0 0.0
    %516 = vmatprep.subr.mxu0 0.0
    %517 = vmatpush1.msra.mxu0 0.0
    %518 = vmatprep.subr.mxu0 0.0
    %519 = vmatpush1.msra.mxu0 0.0
    %520 = vmatprep.subr.mxu0 0.0
    %521 = vmatpush1.msra.mxu0 0.0
    %522 = vmatprep.subr.mxu0 0.0
    %523 = vmatpush1.msra.mxu0 0.0
    %524 = vmatprep.subr.mxu0 0.0
    %525 = vmatpush1.msra.mxu0 0.0
    %526 = vmatprep.subr.mxu0 0.0
    %527 = vmatpush1.msra.mxu0 0.0
    %528 = vmatprep.subr.mxu0 0.0
    %529 = vmatpush1.msra.mxu0 0.0
    %530 = vmatprep.subr.mxu0 0.0
    %531 = vmatpush1.msra.mxu0 0.0
    %532 = vmatprep.subr.mxu0 0.0
    %533 = vmatpush1.msra.mxu0 0.0
    %534 = vmatprep.subr.mxu0 0.0
    %535 = vmatpush1.msra.mxu0 0.0
    %536 = vmatprep.subr.mxu0 0.0
    %537 = vmatpush1.msra.mxu0 0.0
    %538 = vmatprep.subr.mxu0 0.0
    %539 = vmatpush1.msra.mxu0 0.0
    %540 = vmatprep.subr.mxu0 0.0
    %541 = vmatpush1.msra.mxu0 0.0
    %542 = vmatprep.subr.mxu0 0.0
    %543 = vmatpush1.msra.mxu0 0.0
    %544 = vmatprep.subr.mxu0 0.0
    %545 = vmatpush1.msra.mxu0 0.0
    %546 = vmatprep.subr.mxu0 0.0
    %547 = vmatpush1.msra.mxu0 0.0
    %548 = vmatprep.mubr.f32.mxu0 0.0
    %549 = vmatmul.mubr.f32.gmra.mrb[0].mxu0 %v482
    %v550 = vpop.f32.mrb[0].mxu0
    %v551 = vadd.f32 0.0, %v550
    %v552 = vpop.f32.mrb[0].mxu0
    %553 = vdwg.mxu0
    %v555 = vrot.slane %v551, 2
    %v556 = vrot.slane %v551, 3
    %v559 = vadd.f32 %v121, %v555
    %v560 = vadd.f32 %v127, %v556
    %v561 = vxor.u32 %v473, 2147483648
    %v562 = vxor.u32 %v474, 2147483648
    %v563 = vmul.f32 %v561, 1.442695
    %v564 = vpow.pop %v563
    %v565 = vmul.f32 %v562, 1.442695
    %v566 = vpow.pop %v565
    %v567 = vadd.f32 %v564, 1.0
    %v568 = vadd.f32 %v566, 1.0
    %v569 = vrcp.pop %v567
    %v570 = vmul.f32 1.0, %v569
    %v571 = vrcp.pop %v568
    %v572 = vmul.f32 1.0, %v571
    %v573 = vtanh.pop %v473
    %v574 = vtanh.pop %v474
    %v577 = vrot.slane %v328, 7
    %v578 = vrot.slane %v329, 7
    %v581 = vmul.f32 %v570, %v577
    %v582 = vmul.f32 %v572, %v578
    %585 = vrot.lane.b32.xlu0 %v573, 32
    %v586 = vpop.permute.xlu0 %585
    %587 = vrot.lane.b32.xlu0 %v574, 32
    %v588 = vpop.permute.xlu0 %587
    %v591 = vmul.f32 %v570, %v586
    %v592 = vmul.f32 %v572, %v588
    %595 = vrot.lane.b32.xlu0 %v591, 32
    %v596 = vpop.permute.xlu0 %595
    %597 = vrot.lane.b32.xlu0 %v592, 32
    %v598 = vpop.permute.xlu0 %597
    %v601 = vadd.f32 %v581, %v596
    %v602 = vadd.f32 %v582, %v598
    %v603 = vtanh.pop %v601
    %v604 = vtanh.pop %v602
    %607 = vrot.lane.b32.xlu0 %v603, 32
    %v608 = vpop.permute.xlu0 %607
    %609 = vrot.lane.b32.xlu0 %v604, 32
    %v610 = vpop.permute.xlu0 %609
    %v613 = vmul.f32 %v570, %v608
    %v614 = vmul.f32 %v572, %v610
    %v615 = vxor.u32 %v559, 2147483648
    %v616 = vxor.u32 %v560, 2147483648
    %v617 = vmul.f32 %v615, 1.442695
    %v618 = vpow.pop %v617
    %v619 = vmul.f32 %v616, 1.442695
    %v620 = vpow.pop %v619
    %v621 = vadd.f32 %v618, 1.0
    %v622 = vadd.f32 %v620, 1.0
    %v623 = vrcp.pop %v621
    %v624 = vmul.f32 1.0, %v623
    %v625 = vrcp.pop %v622
    %v626 = vmul.f32 1.0, %v625
    %v627 = vtanh.pop %v559
    %v628 = vtanh.pop %v560
    %v631 = vrot.slane %v376, 1
    %v632 = vrot.slane %v377, 1
    %v635 = vmul.f32 %v624, %v631
    %v636 = vmul.f32 %v626, %v632
    %639 = vrot.lane.b32.xlu0 %v627, 32
    %v640 = vpop.permute.xlu0 %639
    %641 = vrot.lane.b32.xlu0 %v628, 32
    %v642 = vpop.permute.xlu0 %641
    %v645 = vmul.f32 %v624, %v640
    %v646 = vmul.f32 %v626, %v642
    %649 = vrot.lane.b32.xlu0 %v645, 32
    %v650 = vpop.permute.xlu0 %649
    %651 = vrot.lane.b32.xlu0 %v646, 32
    %v652 = vpop.permute.xlu0 %651
    %v655 = vadd.f32 %v635, %v650
    %v656 = vadd.f32 %v636, %v652
    %v657 = vtanh.pop %v655
    %v658 = vtanh.pop %v656
    %661 = vrot.lane.b32.xlu0 %v657, 32
    %v662 = vpop.permute.xlu0 %661
    %663 = vrot.lane.b32.xlu0 %v658, 32
    %v664 = vpop.permute.xlu0 %663
    %v667 = vmul.f32 %v624, %v662
    %v668 = vmul.f32 %v626, %v664
    %v671 = vrot.slane %v613, 1
    %v672 = vsel %vm393, %v614, %v671
    %673 = vrot.lane.b32.xlu0 %v672, 64
    %v674 = vpop.permute.xlu0 %673
    %v675 = vsel %vm137, %v674, 0
    %677 = vmatprep.subr.mxu0 0.0
    %678 = vmatpush1.msra.mxu0 %v129
    %679 = vmatprep.subr.mxu0 0.0
    %680 = vmatpush1.msra.mxu0 %v130
    %681 = vmatprep.subr.mxu0 0.0
    %682 = vmatpush1.msra.mxu0 %v131
    %683 = vmatprep.subr.mxu0 0.0
    %684 = vmatpush1.msra.mxu0 %v132
    %685 = vmatprep.subr.mxu0 0.0
    %686 = vmatpush1.msra.mxu0 0.0
    %687 = vmatprep.subr.mxu0 0.0
    %688 = vmatpush1.msra.mxu0 0.0
    %689 = vmatprep.subr.mxu0 0.0
    %690 = vmatpush1.msra.mxu0 0.0
    %691 = vmatprep.subr.mxu0 0.0
    %692 = vmatpush1.msra.mxu0 0.0
    %693 = vmatprep.subr.mxu0 0.0
    %694 = vmatpush1.msra.mxu0 0.0
    %695 = vmatprep.subr.mxu0 0.0
    %696 = vmatpush1.msra.mxu0 0.0
    %697 = vmatprep.subr.mxu0 0.0
    %698 = vmatpush1.msra.mxu0 0.0
    %699 = vmatprep.subr.mxu0 0.0
    %700 = vmatpush1.msra.mxu0 0.0
    %701 = vmatprep.subr.mxu0 0.0
    %702 = vmatpush1.msra.mxu0 0.0
    %703 = vmatprep.subr.mxu0 0.0
    %704 = vmatpush1.msra.mxu0 0.0
    %705 = vmatprep.subr.mxu0 0.0
    %706 = vmatpush1.msra.mxu0 0.0
    %707 = vmatprep.subr.mxu0 0.0
    %708 = vmatpush1.msra.mxu0 0.0
    %709 = vmatprep.subr.mxu0 0.0
    %710 = vmatpush1.msra.mxu0 0.0
    %711 = vmatprep.subr.mxu0 0.0
    %712 = vmatpush1.msra.mxu0 0.0
    %713 = vmatprep.subr.mxu0 0.0
    %714 = vmatpush1.msra.mxu0 0.0
    %715 = vmatprep.subr.mxu0 0.0
    %716 = vmatpush1.msra.mxu0 0.0
    %717 = vmatprep.subr.mxu0 0.0
    %718 = vmatpush1.msra.mxu0 0.0
    %719 = vmatprep.subr.mxu0 0.0
    %720 = vmatpush1.msra.mxu0 0.0
    %721 = vmatprep.subr.mxu0 0.0
    %722 = vmatpush1.msra.mxu0 0.0
    %723 = vmatprep.subr.mxu0 0.0
    %724 = vmatpush1.msra.mxu0 0.0
    %725 = vmatprep.subr.mxu0 0.0
    %726 = vmatpush1.msra.mxu0 0.0
    %727 = vmatprep.subr.mxu0 0.0
    %728 = vmatpush1.msra.mxu0 0.0
    %729 = vmatprep.subr.mxu0 0.0
    %730 = vmatpush1.msra.mxu0 0.0
    %731 = vmatprep.subr.mxu0 0.0
    %732 = vmatpush1.msra.mxu0 0.0
    %733 = vmatprep.subr.mxu0 0.0
    %734 = vmatpush1.msra.mxu0 0.0
    %735 = vmatprep.subr.mxu0 0.0
    %736 = vmatpush1.msra.mxu0 0.0
    %737 = vmatprep.subr.mxu0 0.0
    %738 = vmatpush1.msra.mxu0 0.0
    %739 = vmatprep.subr.mxu0 0.0
    %740 = vmatpush1.msra.mxu0 0.0
    %741 = vmatprep.mubr.f32.mxu0 0.0
    %742 = vmatmul.mubr.f32.gmra.mrb[0].mxu0 %v675
    %v743 = vpop.f32.mrb[0].mxu0
    %v744 = vadd.f32 0.0, %v743
    %v745 = vpop.f32.mrb[0].mxu0
    %746 = vdwg.mxu0
    %v748 = vrot.slane %v744, 6
    %v749 = vrot.slane %v744, 7
    %v752 = vadd.f32 %v119, %v748
    %v753 = vadd.f32 %v125, %v749
    %v756 = vrot.slane %v667, 6
    %v757 = vrot.slane %v668, 5
    %v758 = vsel %vm393, %v757, %v756
    %759 = vrot.lane.b32.xlu0 %v758, 64
    %v760 = vpop.permute.xlu0 %759
    %v761 = vsel %vm137, %v760, 0
    %763 = vmatprep.subr.mxu0 0.0
    %764 = vmatpush1.msra.mxu0 %v133
    %765 = vmatprep.subr.mxu0 0.0
    %766 = vmatpush1.msra.mxu0 %v134
    %767 = vmatprep.subr.mxu0 0.0
    %768 = vmatpush1.msra.mxu0 %v135
    %769 = vmatprep.subr.mxu0 0.0
    %770 = vmatpush1.msra.mxu0 %v136
    %771 = vmatprep.subr.mxu0 0.0
    %772 = vmatpush1.msra.mxu0 0.0
    %773 = vmatprep.subr.mxu0 0.0
    %774 = vmatpush1.msra.mxu0 0.0
    %775 = vmatprep.subr.mxu0 0.0
    %776 = vmatpush1.msra.mxu0 0.0
    %777 = vmatprep.subr.mxu0 0.0
    %778 = vmatpush1.msra.mxu0 0.0
    %779 = vmatprep.subr.mxu0 0.0
    %780 = vmatpush1.msra.mxu0 0.0
    %781 = vmatprep.subr.mxu0 0.0
    %782 = vmatpush1.msra.mxu0 0.0
    %783 = vmatprep.subr.mxu0 0.0
    %784 = vmatpush1.msra.mxu0 0.0
    %785 = vmatprep.subr.mxu0 0.0
    %786 = vmatpush1.msra.mxu0 0.0
    %787 = vmatprep.subr.mxu0 0.0
    %788 = vmatpush1.msra.mxu0 0.0
    %789 = vmatprep.subr.mxu0 0.0
    %790 = vmatpush1.msra.mxu0 0.0
    %791 = vmatprep.subr.mxu0 0.0
    %792 = vmatpush1.msra.mxu0 0.0
    %793 = vmatprep.subr.mxu0 0.0
    %794 = vmatpush1.msra.mxu0 0.0
    %795 = vmatprep.subr.mxu0 0.0
    %796 = vmatpush1.msra.mxu0 0.0
    %797 = vmatprep.subr.mxu0 0.0
    %798 = vmatpush1.msra.mxu0 0.0
    %799 = vmatprep.subr.mxu0 0.0
    %800 = vmatpush1.msra.mxu0 0.0
    %801 = vmatprep.subr.mxu0 0.0
    %802 = vmatpush1.msra.mxu0 0.0
    %803 = vmatprep.subr.mxu0 0.0
    %804 = vmatpush1.msra.mxu0 0.0
    %805 = vmatprep.subr.mxu0 0.0
    %806 = vmatpush1.msra.mxu0 0.0
    %807 = vmatprep.subr.mxu0 0.0
    %808 = vmatpush1.msra.mxu0 0.0
    %809 = vmatprep.subr.mxu0 0.0
    %810 = vmatpush1.msra.mxu0 0.0
    %811 = vmatprep.subr.mxu0 0.0
    %812 = vmatpush1.msra.mxu0 0.0
    %813 = vmatprep.subr.mxu0 0.0
    %814 = vmatpush1.msra.mxu0 0.0
    %815 = vmatprep.subr.mxu0 0.0
    %816 = vmatpush1.msra.mxu0 0.0
    %817 = vmatprep.subr.mxu0 0.0
    %818 = vmatpush1.msra.mxu0 0.0
    %819 = vmatprep.subr.mxu0 0.0
    %820 = vmatpush1.msra.mxu0 0.0
    %821 = vmatprep.subr.mxu0 0.0
    %822 = vmatpush1.msra.mxu0 0.0
    %823 = vmatprep.subr.mxu0 0.0
    %824 = vmatpush1.msra.mxu0 0.0
    %825 = vmatprep.subr.mxu0 0.0
    %826 = vmatpush1.msra.mxu0 0.0
    %827 = vmatprep.mubr.f32.mxu0 0.0
    %828 = vmatmul.mubr.f32.gmra.mrb[0].mxu0 %v761
    %v829 = vpop.f32.mrb[0].mxu0
    %v830 = vadd.f32 0.0, %v829
    %v831 = vpop.f32.mrb[0].mxu0
    %832 = vdwg.mxu0
    %v834 = vrot.slane %v830, 3
    %v835 = vrot.slane %v830, 4
    %v838 = vadd.f32 %v121, %v834
    %v839 = vadd.f32 %v127, %v835
    %v840 = vxor.u32 %v752, 2147483648
    %v841 = vxor.u32 %v753, 2147483648
    %v842 = vmul.f32 %v840, 1.442695
    %v843 = vpow.pop %v842
    %v844 = vmul.f32 %v841, 1.442695
    %v845 = vpow.pop %v844
    %v846 = vadd.f32 %v843, 1.0
    %v847 = vadd.f32 %v845, 1.0
    %v848 = vrcp.pop %v846
    %v849 = vmul.f32 1.0, %v848
    %v850 = vrcp.pop %v847
    %v851 = vmul.f32 1.0, %v850
    %v852 = vtanh.pop %v752
    %v853 = vtanh.pop %v753
    %v856 = vrot.slane %v601, 7
    %v857 = vrot.slane %v602, 7
    %v860 = vmul.f32 %v849, %v856
    %v861 = vmul.f32 %v851, %v857
    %864 = vrot.lane.b32.xlu0 %v852, 32
    %v865 = vpop.permute.xlu0 %864
    %866 = vrot.lane.b32.xlu0 %v853, 32
    %v867 = vpop.permute.xlu0 %866
    %v870 = vmul.f32 %v849, %v865
    %v871 = vmul.f32 %v851, %v867
    %874 = vrot.lane.b32.xlu0 %v870, 32
    %v875 = vpop.permute.xlu0 %874
    %876 = vrot.lane.b32.xlu0 %v871, 32
    %v877 = vpop.permute.xlu0 %876
    %v880 = vadd.f32 %v860, %v875
    %v881 = vadd.f32 %v861, %v877
    %v882 = vtanh.pop %v880
    %v883 = vtanh.pop %v881
    %886 = vrot.lane.b32.xlu0 %v882, 32
    %v887 = vpop.permute.xlu0 %886
    %888 = vrot.lane.b32.xlu0 %v883, 32
    %v889 = vpop.permute.xlu0 %888
    %v892 = vmul.f32 %v849, %v887
    %v893 = vmul.f32 %v851, %v889
    %v894 = vxor.u32 %v838, 2147483648
    %v895 = vxor.u32 %v839, 2147483648
    %v896 = vmul.f32 %v894, 1.442695
    %v897 = vpow.pop %v896
    %v898 = vmul.f32 %v895, 1.442695
    %v899 = vpow.pop %v898
    %v900 = vadd.f32 %v897, 1.0
    %v901 = vadd.f32 %v899, 1.0
    %v902 = vrcp.pop %v900
    %v903 = vmul.f32 1.0, %v902
    %v904 = vrcp.pop %v901
    %v905 = vmul.f32 1.0, %v904
    %v906 = vtanh.pop %v838
    %v907 = vtanh.pop %v839
    %v910 = vrot.slane %v655, 1
    %v911 = vrot.slane %v656, 1
    %v914 = vmul.f32 %v903, %v910
    %v915 = vmul.f32 %v905, %v911
    %918 = vrot.lane.b32.xlu0 %v906, 32
    %v919 = vpop.permute.xlu0 %918
    %920 = vrot.lane.b32.xlu0 %v907, 32
    %v921 = vpop.permute.xlu0 %920
    %v924 = vmul.f32 %v903, %v919
    %v925 = vmul.f32 %v905, %v921
    %928 = vrot.lane.b32.xlu0 %v924, 32
    %v929 = vpop.permute.xlu0 %928
    %930 = vrot.lane.b32.xlu0 %v925, 32
    %v931 = vpop.permute.xlu0 %930
    %v934 = vadd.f32 %v914, %v929
    %v935 = vadd.f32 %v915, %v931
    %v936 = vtanh.pop %v934
    %v937 = vtanh.pop %v935
    %940 = vrot.lane.b32.xlu0 %v936, 32
    %v941 = vpop.permute.xlu0 %940
    %942 = vrot.lane.b32.xlu0 %v937, 32
    %v943 = vpop.permute.xlu0 %942
    %v946 = vmul.f32 %v903, %v941
    %v947 = vmul.f32 %v905, %v943
    %v950 = vrot.slane %v892, 2
    %v951 = vrot.slane %v893, 1
    %v952 = vsel %vm393, %v951, %v950
    %953 = vrot.lane.b32.xlu0 %v952, 64
    %v954 = vpop.permute.xlu0 %953
    %v955 = vsel %vm137, %v954, 0
    %957 = vmatprep.subr.mxu0 0.0
    %958 = vmatpush1.msra.mxu0 %v129
    %959 = vmatprep.subr.mxu0 0.0
    %960 = vmatpush1.msra.mxu0 %v130
    %961 = vmatprep.subr.mxu0 0.0
    %962 = vmatpush1.msra.mxu0 %v131
    %963 = vmatprep.subr.mxu0 0.0
    %964 = vmatpush1.msra.mxu0 %v132
    %965 = vmatprep.subr.mxu0 0.0
    %966 = vmatpush1.msra.mxu0 0.0
    %967 = vmatprep.subr.mxu0 0.0
    %968 = vmatpush1.msra.mxu0 0.0
    %969 = vmatprep.subr.mxu0 0.0
    %970 = vmatpush1.msra.mxu0 0.0
    %971 = vmatprep.subr.mxu0 0.0
    %972 = vmatpush1.msra.mxu0 0.0
    %973 = vmatprep.subr.mxu0 0.0
    %974 = vmatpush1.msra.mxu0 0.0
    %975 = vmatprep.subr.mxu0 0.0
    %976 = vmatpush1.msra.mxu0 0.0
    %977 = vmatprep.subr.mxu0 0.0
    %978 = vmatpush1.msra.mxu0 0.0
    %979 = vmatprep.subr.mxu0 0.0
    %980 = vmatpush1.msra.mxu0 0.0
    %981 = vmatprep.subr.mxu0 0.0
    %982 = vmatpush1.msra.mxu0 0.0
    %983 = vmatprep.subr.mxu0 0.0
    %984 = vmatpush1.msra.mxu0 0.0
    %985 = vmatprep.subr.mxu0 0.0
    %986 = vmatpush1.msra.mxu0 0.0
    %987 = vmatprep.subr.mxu0 0.0
    %988 = vmatpush1.msra.mxu0 0.0
    %989 = vmatprep.subr.mxu0 0.0
    %990 = vmatpush1.msra.mxu0 0.0
    %991 = vmatprep.subr.mxu0 0.0
    %992 = vmatpush1.msra.mxu0 0.0
    %993 = vmatprep.subr.mxu0 0.0
    %994 = vmatpush1.msra.mxu0 0.0
    %995 = vmatprep.subr.mxu0 0.0
    %996 = vmatpush1.msra.mxu0 0.0
    %997 = vmatprep.subr.mxu0 0.0
    %998 = vmatpush1.msra.mxu0 0.0
    %999 = vmatprep.subr.mxu0 0.0
    %1000 = vmatpush1.msra.mxu0 0.0
    %1001 = vmatprep.subr.mxu0 0.0
    %1002 = vmatpush1.msra.mxu0 0.0
    %1003 = vmatprep.subr.mxu0 0.0
    %1004 = vmatpush1.msra.mxu0 0.0
    %1005 = vmatprep.subr.mxu0 0.0
    %1006 = vmatpush1.msra.mxu0 0.0
    %1007 = vmatprep.subr.mxu0 0.0
    %1008 = vmatpush1.msra.mxu0 0.0
    %1009 = vmatprep.subr.mxu0 0.0
    %1010 = vmatpush1.msra.mxu0 0.0
    %1011 = vmatprep.subr.mxu0 0.0
    %1012 = vmatpush1.msra.mxu0 0.0
    %1013 = vmatprep.subr.mxu0 0.0
    %1014 = vmatpush1.msra.mxu0 0.0
    %1015 = vmatprep.subr.mxu0 0.0
    %1016 = vmatpush1.msra.mxu0 0.0
    %1017 = vmatprep.subr.mxu0 0.0
    %1018 = vmatpush1.msra.mxu0 0.0
    %1019 = vmatprep.subr.mxu0 0.0
    %1020 = vmatpush1.msra.mxu0 0.0
    %1021 = vmatprep.mubr.f32.mxu0 0.0
    %1022 = vmatmul.mubr.f32.gmra.mrb[0].mxu0 %v955
    %v1023 = vpop.f32.mrb[0].mxu0
    %v1024 = vadd.f32 0.0, %v1023
    %v1025 = vpop.f32.mrb[0].mxu0
    %1026 = vdwg.mxu0
    %v1028 = vrot.slane %v1024, 5
    %v1029 = vrot.slane %v1024, 6
    %v1032 = vadd.f32 %v119, %v1028
    %v1033 = vadd.f32 %v125, %v1029
    %v1036 = vrot.slane %v946, 5
    %v1037 = vrot.slane %v947, 4
    %v1038 = vsel %vm393, %v1037, %v1036
    %1039 = vrot.lane.b32.xlu0 %v1038, 64
    %v1040 = vpop.permute.xlu0 %1039
    %v1041 = vsel %vm137, %v1040, 0
    %1043 = vmatprep.subr.mxu0 0.0
    %1044 = vmatpush1.msra.mxu0 %v133
    %1045 = vmatprep.subr.mxu0 0.0
    %1046 = vmatpush1.msra.mxu0 %v134
    %1047 = vmatprep.subr.mxu0 0.0
    %1048 = vmatpush1.msra.mxu0 %v135
    %1049 = vmatprep.subr.mxu0 0.0
    %1050 = vmatpush1.msra.mxu0 %v136
    %1051 = vmatprep.subr.mxu0 0.0
    %1052 = vmatpush1.msra.mxu0 0.0
    %1053 = vmatprep.subr.mxu0 0.0
    %1054 = vmatpush1.msra.mxu0 0.0
    %1055 = vmatprep.subr.mxu0 0.0
    %1056 = vmatpush1.msra.mxu0 0.0
    %1057 = vmatprep.subr.mxu0 0.0
    %1058 = vmatpush1.msra.mxu0 0.0
    %1059 = vmatprep.subr.mxu0 0.0
    %1060 = vmatpush1.msra.mxu0 0.0
    %1061 = vmatprep.subr.mxu0 0.0
    %1062 = vmatpush1.msra.mxu0 0.0
    %1063 = vmatprep.subr.mxu0 0.0
    %1064 = vmatpush1.msra.mxu0 0.0
    %1065 = vmatprep.subr.mxu0 0.0
    %1066 = vmatpush1.msra.mxu0 0.0
    %1067 = vmatprep.subr.mxu0 0.0
    %1068 = vmatpush1.msra.mxu0 0.0
    %1069 = vmatprep.subr.mxu0 0.0
    %1070 = vmatpush1.msra.mxu0 0.0
    %1071 = vmatprep.subr.mxu0 0.0
    %1072 = vmatpush1.msra.mxu0 0.0
    %1073 = vmatprep.subr.mxu0 0.0
    %1074 = vmatpush1.msra.mxu0 0.0
    %1075 = vmatprep.subr.mxu0 0.0
    %1076 = vmatpush1.msra.mxu0 0.0
    %1077 = vmatprep.subr.mxu0 0.0
    %1078 = vmatpush1.msra.mxu0 0.0
    %1079 = vmatprep.subr.mxu0 0.0
    %1080 = vmatpush1.msra.mxu0 0.0
    %1081 = vmatprep.subr.mxu0 0.0
    %1082 = vmatpush1.msra.mxu0 0.0
    %1083 = vmatprep.subr.mxu0 0.0
    %1084 = vmatpush1.msra.mxu0 0.0
    %1085 = vmatprep.subr.mxu0 0.0
    %1086 = vmatpush1.msra.mxu0 0.0
    %1087 = vmatprep.subr.mxu0 0.0
    %1088 = vmatpush1.msra.mxu0 0.0
    %1089 = vmatprep.subr.mxu0 0.0
    %1090 = vmatpush1.msra.mxu0 0.0
    %1091 = vmatprep.subr.mxu0 0.0
    %1092 = vmatpush1.msra.mxu0 0.0
    %1093 = vmatprep.subr.mxu0 0.0
    %1094 = vmatpush1.msra.mxu0 0.0
    %1095 = vmatprep.subr.mxu0 0.0
    %1096 = vmatpush1.msra.mxu0 0.0
    %1097 = vmatprep.subr.mxu0 0.0
    %1098 = vmatpush1.msra.mxu0 0.0
    %1099 = vmatprep.subr.mxu0 0.0
    %1100 = vmatpush1.msra.mxu0 0.0
    %1101 = vmatprep.subr.mxu0 0.0
    %1102 = vmatpush1.msra.mxu0 0.0
    %1103 = vmatprep.subr.mxu0 0.0
    %1104 = vmatpush1.msra.mxu0 0.0
    %1105 = vmatprep.subr.mxu0 0.0
    %1106 = vmatpush1.msra.mxu0 0.0
    %1107 = vmatprep.mubr.f32.mxu0 0.0
    %1108 = vmatmul.mubr.f32.gmra.mrb[0].mxu0 %v1041
    %v1109 = vpop.f32.mrb[0].mxu0
    %v1110 = vadd.f32 0.0, %v1109
    %v1111 = vpop.f32.mrb[0].mxu0
    %1112 = vdwg.mxu0
    %v1114 = vrot.slane %v1110, 4
    %v1115 = vrot.slane %v1110, 5
    %v1118 = vadd.f32 %v121, %v1114
    %v1119 = vadd.f32 %v127, %v1115
    %v1120 = vxor.u32 %v1032, 2147483648
    %v1121 = vxor.u32 %v1033, 2147483648
    %v1122 = vmul.f32 %v1120, 1.442695
    %v1123 = vpow.pop %v1122
    %v1124 = vmul.f32 %v1121, 1.442695
    %v1125 = vpow.pop %v1124
    %v1126 = vadd.f32 %v1123, 1.0
    %v1127 = vadd.f32 %v1125, 1.0
    %v1128 = vrcp.pop %v1126
    %v1129 = vmul.f32 1.0, %v1128
    %v1130 = vrcp.pop %v1127
    %v1131 = vmul.f32 1.0, %v1130
    %v1132 = vtanh.pop %v1032
    %v1133 = vtanh.pop %v1033
    %v1136 = vrot.slane %v880, 7
    %v1137 = vrot.slane %v881, 7
    %v1140 = vmul.f32 %v1129, %v1136
    %v1141 = vmul.f32 %v1131, %v1137
    %1144 = vrot.lane.b32.xlu0 %v1132, 32
    %v1145 = vpop.permute.xlu0 %1144
    %1146 = vrot.lane.b32.xlu0 %v1133, 32
    %v1147 = vpop.permute.xlu0 %1146
    %v1150 = vmul.f32 %v1129, %v1145
    %v1151 = vmul.f32 %v1131, %v1147
    %1154 = vrot.lane.b32.xlu0 %v1150, 32
    %v1155 = vpop.permute.xlu0 %1154
    %1156 = vrot.lane.b32.xlu0 %v1151, 32
    %v1157 = vpop.permute.xlu0 %1156
    %v1160 = vadd.f32 %v1140, %v1155
    %v1161 = vadd.f32 %v1141, %v1157
    %v1162 = vtanh.pop %v1160
    %v1163 = vtanh.pop %v1161
    %1166 = vrot.lane.b32.xlu0 %v1162, 32
    %v1167 = vpop.permute.xlu0 %1166
    %1168 = vrot.lane.b32.xlu0 %v1163, 32
    %v1169 = vpop.permute.xlu0 %1168
    %v1172 = vmul.f32 %v1129, %v1167
    %v1173 = vmul.f32 %v1131, %v1169
    %v1174 = vxor.u32 %v1118, 2147483648
    %v1175 = vxor.u32 %v1119, 2147483648
    %v1176 = vmul.f32 %v1174, 1.442695
    %v1177 = vpow.pop %v1176
    %v1178 = vmul.f32 %v1175, 1.442695
    %v1179 = vpow.pop %v1178
    %v1180 = vadd.f32 %v1177, 1.0
    %v1181 = vadd.f32 %v1179, 1.0
    %v1182 = vrcp.pop %v1180
    %v1183 = vmul.f32 1.0, %v1182
    %v1184 = vrcp.pop %v1181
    %v1185 = vmul.f32 1.0, %v1184
    %v1186 = vtanh.pop %v1118
    %v1187 = vtanh.pop %v1119
    %v1190 = vrot.slane %v934, 1
    %v1191 = vrot.slane %v935, 1
    %v1194 = vmul.f32 %v1183, %v1190
    %v1195 = vmul.f32 %v1185, %v1191
    %1198 = vrot.lane.b32.xlu0 %v1186, 32
    %v1199 = vpop.permute.xlu0 %1198
    %1200 = vrot.lane.b32.xlu0 %v1187, 32
    %v1201 = vpop.permute.xlu0 %1200
    %v1204 = vmul.f32 %v1183, %v1199
    %v1205 = vmul.f32 %v1185, %v1201
    %1208 = vrot.lane.b32.xlu0 %v1204, 32
    %v1209 = vpop.permute.xlu0 %1208
    %1210 = vrot.lane.b32.xlu0 %v1205, 32
    %v1211 = vpop.permute.xlu0 %1210
    %v1214 = vadd.f32 %v1194, %v1209
    %v1215 = vadd.f32 %v1195, %v1211
    %v1216 = vtanh.pop %v1214
    %v1217 = vtanh.pop %v1215
    %1220 = vrot.lane.b32.xlu0 %v1216, 32
    %v1221 = vpop.permute.xlu0 %1220
    %1222 = vrot.lane.b32.xlu0 %v1217, 32
    %v1223 = vpop.permute.xlu0 %1222
    %v1226 = vmul.f32 %v1183, %v1221
    %v1227 = vmul.f32 %v1185, %v1223
    %v1230 = vrot.slane %v1172, 3
    %v1231 = vrot.slane %v1173, 2
    %v1232 = vsel %vm393, %v1231, %v1230
    %1233 = vrot.lane.b32.xlu0 %v1232, 64
    %v1234 = vpop.permute.xlu0 %1233
    %v1235 = vsel %vm137, %v1234, 0
    %1237 = vmatprep.subr.mxu0 0.0
    %1238 = vmatpush1.msra.mxu0 %v129
    %1239 = vmatprep.subr.mxu0 0.0
    %1240 = vmatpush1.msra.mxu0 %v130
    %1241 = vmatprep.subr.mxu0 0.0
    %1242 = vmatpush1.msra.mxu0 %v131
    %1243 = vmatprep.subr.mxu0 0.0
    %1244 = vmatpush1.msra.mxu0 %v132
    %1245 = vmatprep.subr.mxu0 0.0
    %1246 = vmatpush1.msra.mxu0 0.0
    %1247 = vmatprep.subr.mxu0 0.0
    %1248 = vmatpush1.msra.mxu0 0.0
    %1249 = vmatprep.subr.mxu0 0.0
    %1250 = vmatpush1.msra.mxu0 0.0
    %1251 = vmatprep.subr.mxu0 0.0
    %1252 = vmatpush1.msra.mxu0 0.0
    %1253 = vmatprep.subr.mxu0 0.0
    %1254 = vmatpush1.msra.mxu0 0.0
    %1255 = vmatprep.subr.mxu0 0.0
    %1256 = vmatpush1.msra.mxu0 0.0
    %1257 = vmatprep.subr.mxu0 0.0
    %1258 = vmatpush1.msra.mxu0 0.0
    %1259 = vmatprep.subr.mxu0 0.0
    %1260 = vmatpush1.msra.mxu0 0.0
    %1261 = vmatprep.subr.mxu0 0.0
    %1262 = vmatpush1.msra.mxu0 0.0
    %1263 = vmatprep.subr.mxu0 0.0
    %1264 = vmatpush1.msra.mxu0 0.0
    %1265 = vmatprep.subr.mxu0 0.0
    %1266 = vmatpush1.msra.mxu0 0.0
    %1267 = vmatprep.subr.mxu0 0.0
    %1268 = vmatpush1.msra.mxu0 0.0
    %1269 = vmatprep.subr.mxu0 0.0
    %1270 = vmatpush1.msra.mxu0 0.0
    %1271 = vmatprep.subr.mxu0 0.0
    %1272 = vmatpush1.msra.mxu0 0.0
    %1273 = vmatprep.subr.mxu0 0.0
    %1274 = vmatpush1.msra.mxu0 0.0
    %1275 = vmatprep.subr.mxu0 0.0
    %1276 = vmatpush1.msra.mxu0 0.0
    %1277 = vmatprep.subr.mxu0 0.0
    %1278 = vmatpush1.msra.mxu0 0.0
    %1279 = vmatprep.subr.mxu0 0.0
    %1280 = vmatpush1.msra.mxu0 0.0
    %1281 = vmatprep.subr.mxu0 0.0
    %1282 = vmatpush1.msra.mxu0 0.0
    %1283 = vmatprep.subr.mxu0 0.0
    %1284 = vmatpush1.msra.mxu0 0.0
    %1285 = vmatprep.subr.mxu0 0.0
    %1286 = vmatpush1.msra.mxu0 0.0
    %1287 = vmatprep.subr.mxu0 0.0
    %1288 = vmatpush1.msra.mxu0 0.0
    %1289 = vmatprep.subr.mxu0 0.0
    %1290 = vmatpush1.msra.mxu0 0.0
    %1291 = vmatprep.subr.mxu0 0.0
    %1292 = vmatpush1.msra.mxu0 0.0
    %1293 = vmatprep.subr.mxu0 0.0
    %1294 = vmatpush1.msra.mxu0 0.0
    %1295 = vmatprep.subr.mxu0 0.0
    %1296 = vmatpush1.msra.mxu0 0.0
    %1297 = vmatprep.subr.mxu0 0.0
    %1298 = vmatpush1.msra.mxu0 0.0
    %1299 = vmatprep.subr.mxu0 0.0
    %1300 = vmatpush1.msra.mxu0 0.0
    %1301 = vmatprep.mubr.f32.mxu0 0.0
    %1302 = vmatmul.mubr.f32.gmra.mrb[0].mxu0 %v1235
    %v1303 = vpop.f32.mrb[0].mxu0
    %v1304 = vadd.f32 0.0, %v1303
    %v1305 = vpop.f32.mrb[0].mxu0
    %1306 = vdwg.mxu0
    %v1308 = vrot.slane %v1304, 4
    %v1309 = vrot.slane %v1304, 5
    %v1312 = vadd.f32 %v119, %v1308
    %v1313 = vadd.f32 %v125, %v1309
    %v1316 = vrot.slane %v1226, 4
    %v1317 = vrot.slane %v1227, 3
    %v1318 = vsel %vm393, %v1317, %v1316
    %1319 = vrot.lane.b32.xlu0 %v1318, 64
    %v1320 = vpop.permute.xlu0 %1319
    %v1321 = vsel %vm137, %v1320, 0
    %1323 = vmatprep.subr.mxu0 0.0
    %1324 = vmatpush1.msra.mxu0 %v133
    %1325 = vmatprep.subr.mxu0 0.0
    %1326 = vmatpush1.msra.mxu0 %v134
    %1327 = vmatprep.subr.mxu0 0.0
    %1328 = vmatpush1.msra.mxu0 %v135
    %1329 = vmatprep.subr.mxu0 0.0
    %1330 = vmatpush1.msra.mxu0 %v136
    %1331 = vmatprep.subr.mxu0 0.0
    %1332 = vmatpush1.msra.mxu0 0.0
    %1333 = vmatprep.subr.mxu0 0.0
    %1334 = vmatpush1.msra.mxu0 0.0
    %1335 = vmatprep.subr.mxu0 0.0
    %1336 = vmatpush1.msra.mxu0 0.0
    %1337 = vmatprep.subr.mxu0 0.0
    %1338 = vmatpush1.msra.mxu0 0.0
    %1339 = vmatprep.subr.mxu0 0.0
    %1340 = vmatpush1.msra.mxu0 0.0
    %1341 = vmatprep.subr.mxu0 0.0
    %1342 = vmatpush1.msra.mxu0 0.0
    %1343 = vmatprep.subr.mxu0 0.0
    %1344 = vmatpush1.msra.mxu0 0.0
    %1345 = vmatprep.subr.mxu0 0.0
    %1346 = vmatpush1.msra.mxu0 0.0
    %1347 = vmatprep.subr.mxu0 0.0
    %1348 = vmatpush1.msra.mxu0 0.0
    %1349 = vmatprep.subr.mxu0 0.0
    %1350 = vmatpush1.msra.mxu0 0.0
    %1351 = vmatprep.subr.mxu0 0.0
    %1352 = vmatpush1.msra.mxu0 0.0
    %1353 = vmatprep.subr.mxu0 0.0
    %1354 = vmatpush1.msra.mxu0 0.0
    %1355 = vmatprep.subr.mxu0 0.0
    %1356 = vmatpush1.msra.mxu0 0.0
    %1357 = vmatprep.subr.mxu0 0.0
    %1358 = vmatpush1.msra.mxu0 0.0
    %1359 = vmatprep.subr.mxu0 0.0
    %1360 = vmatpush1.msra.mxu0 0.0
    %1361 = vmatprep.subr.mxu0 0.0
    %1362 = vmatpush1.msra.mxu0 0.0
    %1363 = vmatprep.subr.mxu0 0.0
    %1364 = vmatpush1.msra.mxu0 0.0
    %1365 = vmatprep.subr.mxu0 0.0
    %1366 = vmatpush1.msra.mxu0 0.0
    %1367 = vmatprep.subr.mxu0 0.0
    %1368 = vmatpush1.msra.mxu0 0.0
    %1369 = vmatprep.subr.mxu0 0.0
    %1370 = vmatpush1.msra.mxu0 0.0
    %1371 = vmatprep.subr.mxu0 0.0
    %1372 = vmatpush1.msra.mxu0 0.0
    %1373 = vmatprep.subr.mxu0 0.0
    %1374 = vmatpush1.msra.mxu0 0.0
    %1375 = vmatprep.subr.mxu0 0.0
    %1376 = vmatpush1.msra.mxu0 0.0
    %1377 = vmatprep.subr.mxu0 0.0
    %1378 = vmatpush1.msra.mxu0 0.0
    %1379 = vmatprep.subr.mxu0 0.0
    %1380 = vmatpush1.msra.mxu0 0.0
    %1381 = vmatprep.subr.mxu0 0.0
    %1382 = vmatpush1.msra.mxu0 0.0
    %1383 = vmatprep.subr.mxu0 0.0
    %1384 = vmatpush1.msra.mxu0 0.0
    %1385 = vmatprep.subr.mxu0 0.0
    %1386 = vmatpush1.msra.mxu0 0.0
    %1387 = vmatprep.mubr.f32.mxu0 0.0
    %1388 = vmatmul.mubr.f32.gmra.mrb[0].mxu0 %v1321
    %v1389 = vpop.f32.mrb[0].mxu0
    %v1390 = vadd.f32 0.0, %v1389
    %v1391 = vpop.f32.mrb[0].mxu0
    %1392 = vdwg.mxu0
    %v1394 = vrot.slane %v1390, 5
    %v1395 = vrot.slane %v1390, 6
    %v1398 = vadd.f32 %v121, %v1394
    %v1399 = vadd.f32 %v127, %v1395
    %v1400 = vxor.u32 %v1312, 2147483648
    %v1401 = vxor.u32 %v1313, 2147483648
    %v1402 = vmul.f32 %v1400, 1.442695
    %v1403 = vpow.pop %v1402
    %v1404 = vmul.f32 %v1401, 1.442695
    %v1405 = vpow.pop %v1404
    %v1406 = vadd.f32 %v1403, 1.0
    %v1407 = vadd.f32 %v1405, 1.0
    %v1408 = vrcp.pop %v1406
    %v1409 = vmul.f32 1.0, %v1408
    %v1410 = vrcp.pop %v1407
    %v1411 = vmul.f32 1.0, %v1410
    %v1412 = vtanh.pop %v1312
    %v1413 = vtanh.pop %v1313
    %v1416 = vrot.slane %v1160, 7
    %v1417 = vrot.slane %v1161, 7
    %v1420 = vmul.f32 %v1409, %v1416
    %v1421 = vmul.f32 %v1411, %v1417
    %1424 = vrot.lane.b32.xlu0 %v1412, 32
    %v1425 = vpop.permute.xlu0 %1424
    %1426 = vrot.lane.b32.xlu0 %v1413, 32
    %v1427 = vpop.permute.xlu0 %1426
    %v1430 = vmul.f32 %v1409, %v1425
    %v1431 = vmul.f32 %v1411, %v1427
    %1434 = vrot.lane.b32.xlu0 %v1430, 32
    %v1435 = vpop.permute.xlu0 %1434
    %1436 = vrot.lane.b32.xlu0 %v1431, 32
    %v1437 = vpop.permute.xlu0 %1436
    %v1440 = vadd.f32 %v1420, %v1435
    %v1441 = vadd.f32 %v1421, %v1437
    %v1442 = vtanh.pop %v1440
    %v1443 = vtanh.pop %v1441
    %1446 = vrot.lane.b32.xlu0 %v1442, 32
    %v1447 = vpop.permute.xlu0 %1446
    %1448 = vrot.lane.b32.xlu0 %v1443, 32
    %v1449 = vpop.permute.xlu0 %1448
    %v1452 = vmul.f32 %v1409, %v1447
    %v1453 = vmul.f32 %v1411, %v1449
    %v1454 = vxor.u32 %v1398, 2147483648
    %v1455 = vxor.u32 %v1399, 2147483648
    %v1456 = vmul.f32 %v1454, 1.442695
    %v1457 = vpow.pop %v1456
    %v1458 = vmul.f32 %v1455, 1.442695
    %v1459 = vpow.pop %v1458
    %v1460 = vadd.f32 %v1457, 1.0
    %v1461 = vadd.f32 %v1459, 1.0
    %v1462 = vrcp.pop %v1460
    %v1463 = vmul.f32 1.0, %v1462
    %v1464 = vrcp.pop %v1461
    %v1465 = vmul.f32 1.0, %v1464
    %v1466 = vtanh.pop %v1398
    %v1467 = vtanh.pop %v1399
    %v1470 = vrot.slane %v1214, 1
    %v1471 = vrot.slane %v1215, 1
    %v1474 = vmul.f32 %v1463, %v1470
    %v1475 = vmul.f32 %v1465, %v1471
    %1478 = vrot.lane.b32.xlu0 %v1466, 32
    %v1479 = vpop.permute.xlu0 %1478
    %1480 = vrot.lane.b32.xlu0 %v1467, 32
    %v1481 = vpop.permute.xlu0 %1480
    %v1484 = vmul.f32 %v1463, %v1479
    %v1485 = vmul.f32 %v1465, %v1481
    %1488 = vrot.lane.b32.xlu0 %v1484, 32
    %v1489 = vpop.permute.xlu0 %1488
    %1490 = vrot.lane.b32.xlu0 %v1485, 32
    %v1491 = vpop.permute.xlu0 %1490
    %v1494 = vadd.f32 %v1474, %v1489
    %v1495 = vadd.f32 %v1475, %v1491
    %v1496 = vtanh.pop %v1494
    %v1497 = vtanh.pop %v1495
    %1500 = vrot.lane.b32.xlu0 %v1496, 32
    %v1501 = vpop.permute.xlu0 %1500
    %1502 = vrot.lane.b32.xlu0 %v1497, 32
    %v1503 = vpop.permute.xlu0 %1502
    %v1506 = vmul.f32 %v1463, %v1501
    %v1507 = vmul.f32 %v1465, %v1503
    %v1510 = vrot.slane %v1452, 4
    %v1511 = vrot.slane %v1453, 3
    %v1512 = vsel %vm393, %v1511, %v1510
    %1513 = vrot.lane.b32.xlu0 %v1512, 64
    %v1514 = vpop.permute.xlu0 %1513
    %v1515 = vsel %vm137, %v1514, 0
    %1517 = vmatprep.subr.mxu0 0.0
    %1518 = vmatpush1.msra.mxu0 %v129
    %1519 = vmatprep.subr.mxu0 0.0
    %1520 = vmatpush1.msra.mxu0 %v130
    %1521 = vmatprep.subr.mxu0 0.0
    %1522 = vmatpush1.msra.mxu0 %v131
    %1523 = vmatprep.subr.mxu0 0.0
    %1524 = vmatpush1.msra.mxu0 %v132
    %1525 = vmatprep.subr.mxu0 0.0
    %1526 = vmatpush1.msra.mxu0 0.0
    %1527 = vmatprep.subr.mxu0 0.0
    %1528 = vmatpush1.msra.mxu0 0.0
    %1529 = vmatprep.subr.mxu0 0.0
    %1530 = vmatpush1.msra.mxu0 0.0
    %1531 = vmatprep.subr.mxu0 0.0
    %1532 = vmatpush1.msra.mxu0 0.0
    %1533 = vmatprep.subr.mxu0 0.0
    %1534 = vmatpush1.msra.mxu0 0.0
    %1535 = vmatprep.subr.mxu0 0.0
    %1536 = vmatpush1.msra.mxu0 0.0
    %1537 = vmatprep.subr.mxu0 0.0
    %1538 = vmatpush1.msra.mxu0 0.0
    %1539 = vmatprep.subr.mxu0 0.0
    %1540 = vmatpush1.msra.mxu0 0.0
    %1541 = vmatprep.subr.mxu0 0.0
    %1542 = vmatpush1.msra.mxu0 0.0
    %1543 = vmatprep.subr.mxu0 0.0
    %1544 = vmatpush1.msra.mxu0 0.0
    %1545 = vmatprep.subr.mxu0 0.0
    %1546 = vmatpush1.msra.mxu0 0.0
    %1547 = vmatprep.subr.mxu0 0.0
    %1548 = vmatpush1.msra.mxu0 0.0
    %1549 = vmatprep.subr.mxu0 0.0
    %1550 = vmatpush1.msra.mxu0 0.0
    %1551 = vmatprep.subr.mxu0 0.0
    %1552 = vmatpush1.msra.mxu0 0.0
    %1553 = vmatprep.subr.mxu0 0.0
    %1554 = vmatpush1.msra.mxu0 0.0
    %1555 = vmatprep.subr.mxu0 0.0
    %1556 = vmatpush1.msra.mxu0 0.0
    %1557 = vmatprep.subr.mxu0 0.0
    %1558 = vmatpush1.msra.mxu0 0.0
    %1559 = vmatprep.subr.mxu0 0.0
    %1560 = vmatpush1.msra.mxu0 0.0
    %1561 = vmatprep.subr.mxu0 0.0
    %1562 = vmatpush1.msra.mxu0 0.0
    %1563 = vmatprep.subr.mxu0 0.0
    %1564 = vmatpush1.msra.mxu0 0.0
    %1565 = vmatprep.subr.mxu0 0.0
    %1566 = vmatpush1.msra.mxu0 0.0
    %1567 = vmatprep.subr.mxu0 0.0
    %1568 = vmatpush1.msra.mxu0 0.0
    %1569 = vmatprep.subr.mxu0 0.0
    %1570 = vmatpush1.msra.mxu0 0.0
    %1571 = vmatprep.subr.mxu0 0.0
    %1572 = vmatpush1.msra.mxu0 0.0
    %1573 = vmatprep.subr.mxu0 0.0
    %1574 = vmatpush1.msra.mxu0 0.0
    %1575 = vmatprep.subr.mxu0 0.0
    %1576 = vmatpush1.msra.mxu0 0.0
    %1577 = vmatprep.subr.mxu0 0.0
    %1578 = vmatpush1.msra.mxu0 0.0
    %1579 = vmatprep.subr.mxu0 0.0
    %1580 = vmatpush1.msra.mxu0 0.0
    %1581 = vmatprep.mubr.f32.mxu0 0.0
    %1582 = vmatmul.mubr.f32.gmra.mrb[0].mxu0 %v1515
    %v1583 = vpop.f32.mrb[0].mxu0
    %v1584 = vadd.f32 0.0, %v1583
    %v1585 = vpop.f32.mrb[0].mxu0
    %1586 = vdwg.mxu0
    %v1588 = vrot.slane %v1584, 3
    %v1589 = vrot.slane %v1584, 4
    %v1592 = vadd.f32 %v119, %v1588
    %v1593 = vadd.f32 %v125, %v1589
    %v1596 = vrot.slane %v1506, 3
    %v1597 = vrot.slane %v1507, 2
    %v1598 = vsel %vm393, %v1597, %v1596
    %1599 = vrot.lane.b32.xlu0 %v1598, 64
    %v1600 = vpop.permute.xlu0 %1599
    %v1601 = vsel %vm137, %v1600, 0
    %1603 = vmatprep.subr.mxu0 0.0
    %1604 = vmatpush1.msra.mxu0 %v133
    %1605 = vmatprep.subr.mxu0 0.0
    %1606 = vmatpush1.msra.mxu0 %v134
    %1607 = vmatprep.subr.mxu0 0.0
    %1608 = vmatpush1.msra.mxu0 %v135
    %1609 = vmatprep.subr.mxu0 0.0
    %1610 = vmatpush1.msra.mxu0 %v136
    %1611 = vmatprep.subr.mxu0 0.0
    %1612 = vmatpush1.msra.mxu0 0.0
    %1613 = vmatprep.subr.mxu0 0.0
    %1614 = vmatpush1.msra.mxu0 0.0
    %1615 = vmatprep.subr.mxu0 0.0
    %1616 = vmatpush1.msra.mxu0 0.0
    %1617 = vmatprep.subr.mxu0 0.0
    %1618 = vmatpush1.msra.mxu0 0.0
    %1619 = vmatprep.subr.mxu0 0.0
    %1620 = vmatpush1.msra.mxu0 0.0
    %1621 = vmatprep.subr.mxu0 0.0
    %1622 = vmatpush1.msra.mxu0 0.0
    %1623 = vmatprep.subr.mxu0 0.0
    %1624 = vmatpush1.msra.mxu0 0.0
    %1625 = vmatprep.subr.mxu0 0.0
    %1626 = vmatpush1.msra.mxu0 0.0
    %1627 = vmatprep.subr.mxu0 0.0
    %1628 = vmatpush1.msra.mxu0 0.0
    %1629 = vmatprep.subr.mxu0 0.0
    %1630 = vmatpush1.msra.mxu0 0.0
    %1631 = vmatprep.subr.mxu0 0.0
    %1632 = vmatpush1.msra.mxu0 0.0
    %1633 = vmatprep.subr.mxu0 0.0
    %1634 = vmatpush1.msra.mxu0 0.0
    %1635 = vmatprep.subr.mxu0 0.0
    %1636 = vmatpush1.msra.mxu0 0.0
    %1637 = vmatprep.subr.mxu0 0.0
    %1638 = vmatpush1.msra.mxu0 0.0
    %1639 = vmatprep.subr.mxu0 0.0
    %1640 = vmatpush1.msra.mxu0 0.0
    %1641 = vmatprep.subr.mxu0 0.0
    %1642 = vmatpush1.msra.mxu0 0.0
    %1643 = vmatprep.subr.mxu0 0.0
    %1644 = vmatpush1.msra.mxu0 0.0
    %1645 = vmatprep.subr.mxu0 0.0
    %1646 = vmatpush1.msra.mxu0 0.0
    %1647 = vmatprep.subr.mxu0 0.0
    %1648 = vmatpush1.msra.mxu0 0.0
    %1649 = vmatprep.subr.mxu0 0.0
    %1650 = vmatpush1.msra.mxu0 0.0
    %1651 = vmatprep.subr.mxu0 0.0
    %1652 = vmatpush1.msra.mxu0 0.0
    %1653 = vmatprep.subr.mxu0 0.0
    %1654 = vmatpush1.msra.mxu0 0.0
    %1655 = vmatprep.subr.mxu0 0.0
    %1656 = vmatpush1.msra.mxu0 0.0
    %1657 = vmatprep.subr.mxu0 0.0
    %1658 = vmatpush1.msra.mxu0 0.0
    %1659 = vmatprep.subr.mxu0 0.0
    %1660 = vmatpush1.msra.mxu0 0.0
    %1661 = vmatprep.subr.mxu0 0.0
    %1662 = vmatpush1.msra.mxu0 0.0
    %1663 = vmatprep.subr.mxu0 0.0
    %1664 = vmatpush1.msra.mxu0 0.0
    %1665 = vmatprep.subr.mxu0 0.0
    %1666 = vmatpush1.msra.mxu0 0.0
    %1667 = vmatprep.mubr.f32.mxu0 0.0
    %1668 = vmatmul.mubr.f32.gmra.mrb[0].mxu0 %v1601
    %v1669 = vpop.f32.mrb[0].mxu0
    %v1670 = vadd.f32 0.0, %v1669
    %v1671 = vpop.f32.mrb[0].mxu0
    %1672 = vdwg.mxu0
    %v1674 = vrot.slane %v1670, 6
    %v1675 = vrot.slane %v1670, 7
    %v1678 = vadd.f32 %v121, %v1674
    %v1679 = vadd.f32 %v127, %v1675
    %v1680 = vxor.u32 %v1592, 2147483648
    %v1681 = vxor.u32 %v1593, 2147483648
    %v1682 = vmul.f32 %v1680, 1.442695
    %v1683 = vpow.pop %v1682
    %v1684 = vmul.f32 %v1681, 1.442695
    %v1685 = vpow.pop %v1684
    %v1686 = vadd.f32 %v1683, 1.0
    %v1687 = vadd.f32 %v1685, 1.0
    %v1688 = vrcp.pop %v1686
    %v1689 = vmul.f32 1.0, %v1688
    %v1690 = vrcp.pop %v1687
    %v1691 = vmul.f32 1.0, %v1690
    %v1692 = vtanh.pop %v1592
    %v1693 = vtanh.pop %v1593
    %v1696 = vrot.slane %v1440, 7
    %v1697 = vrot.slane %v1441, 7
    %v1700 = vmul.f32 %v1689, %v1696
    %v1701 = vmul.f32 %v1691, %v1697
    %1704 = vrot.lane.b32.xlu0 %v1692, 32
    %v1705 = vpop.permute.xlu0 %1704
    %1706 = vrot.lane.b32.xlu0 %v1693, 32
    %v1707 = vpop.permute.xlu0 %1706
    %v1710 = vmul.f32 %v1689, %v1705
    %v1711 = vmul.f32 %v1691, %v1707
    %1714 = vrot.lane.b32.xlu0 %v1710, 32
    %v1715 = vpop.permute.xlu0 %1714
    %1716 = vrot.lane.b32.xlu0 %v1711, 32
    %v1717 = vpop.permute.xlu0 %1716
    %v1720 = vadd.f32 %v1700, %v1715
    %v1721 = vadd.f32 %v1701, %v1717
    %v1722 = vtanh.pop %v1720
    %v1723 = vtanh.pop %v1721
    %1726 = vrot.lane.b32.xlu0 %v1722, 32
    %v1727 = vpop.permute.xlu0 %1726
    %1728 = vrot.lane.b32.xlu0 %v1723, 32
    %v1729 = vpop.permute.xlu0 %1728
    %v1732 = vmul.f32 %v1689, %v1727
    %v1733 = vmul.f32 %v1691, %v1729
    %v1734 = vxor.u32 %v1678, 2147483648
    %v1735 = vxor.u32 %v1679, 2147483648
    %v1736 = vmul.f32 %v1734, 1.442695
    %v1737 = vpow.pop %v1736
    %v1738 = vmul.f32 %v1735, 1.442695
    %v1739 = vpow.pop %v1738
    %v1740 = vadd.f32 %v1737, 1.0
    %v1741 = vadd.f32 %v1739, 1.0
    %v1742 = vrcp.pop %v1740
    %v1743 = vmul.f32 1.0, %v1742
    %v1744 = vrcp.pop %v1741
    %v1745 = vmul.f32 1.0, %v1744
    %v1746 = vtanh.pop %v1678
    %v1747 = vtanh.pop %v1679
    %v1750 = vrot.slane %v1494, 1
    %v1751 = vrot.slane %v1495, 1
    %v1754 = vmul.f32 %v1743, %v1750
    %v1755 = vmul.f32 %v1745, %v1751
    %1758 = vrot.lane.b32.xlu0 %v1746, 32
    %v1759 = vpop.permute.xlu0 %1758
    %1760 = vrot.lane.b32.xlu0 %v1747, 32
    %v1761 = vpop.permute.xlu0 %1760
    %v1764 = vmul.f32 %v1743, %v1759
    %v1765 = vmul.f32 %v1745, %v1761
    %1768 = vrot.lane.b32.xlu0 %v1764, 32
    %v1769 = vpop.permute.xlu0 %1768
    %1770 = vrot.lane.b32.xlu0 %v1765, 32
    %v1771 = vpop.permute.xlu0 %1770
    %v1774 = vadd.f32 %v1754, %v1769
    %v1775 = vadd.f32 %v1755, %v1771
    %v1776 = vtanh.pop %v1774
    %v1777 = vtanh.pop %v1775
    %1780 = vrot.lane.b32.xlu0 %v1776, 32
    %v1781 = vpop.permute.xlu0 %1780
    %1782 = vrot.lane.b32.xlu0 %v1777, 32
    %v1783 = vpop.permute.xlu0 %1782
    %v1786 = vmul.f32 %v1743, %v1781
    %v1787 = vmul.f32 %v1745, %v1783
    %v1790 = vrot.slane %v1732, 5
    %v1791 = vrot.slane %v1733, 4
    %v1792 = vsel %vm393, %v1791, %v1790
    %1793 = vrot.lane.b32.xlu0 %v1792, 64
    %v1794 = vpop.permute.xlu0 %1793
    %v1795 = vsel %vm137, %v1794, 0
    %1797 = vmatprep.subr.mxu0 0.0
    %1798 = vmatpush1.msra.mxu0 %v129
    %1799 = vmatprep.subr.mxu0 0.0
    %1800 = vmatpush1.msra.mxu0 %v130
    %1801 = vmatprep.subr.mxu0 0.0
    %1802 = vmatpush1.msra.mxu0 %v131
    %1803 = vmatprep.subr.mxu0 0.0
    %1804 = vmatpush1.msra.mxu0 %v132
    %1805 = vmatprep.subr.mxu0 0.0
    %1806 = vmatpush1.msra.mxu0 0.0
    %1807 = vmatprep.subr.mxu0 0.0
    %1808 = vmatpush1.msra.mxu0 0.0
    %1809 = vmatprep.subr.mxu0 0.0
    %1810 = vmatpush1.msra.mxu0 0.0
    %1811 = vmatprep.subr.mxu0 0.0
    %1812 = vmatpush1.msra.mxu0 0.0
    %1813 = vmatprep.subr.mxu0 0.0
    %1814 = vmatpush1.msra.mxu0 0.0
    %1815 = vmatprep.subr.mxu0 0.0
    %1816 = vmatpush1.msra.mxu0 0.0
    %1817 = vmatprep.subr.mxu0 0.0
    %1818 = vmatpush1.msra.mxu0 0.0
    %1819 = vmatprep.subr.mxu0 0.0
    %1820 = vmatpush1.msra.mxu0 0.0
    %1821 = vmatprep.subr.mxu0 0.0
    %1822 = vmatpush1.msra.mxu0 0.0
    %1823 = vmatprep.subr.mxu0 0.0
    %1824 = vmatpush1.msra.mxu0 0.0
    %1825 = vmatprep.subr.mxu0 0.0
    %1826 = vmatpush1.msra.mxu0 0.0
    %1827 = vmatprep.subr.mxu0 0.0
    %1828 = vmatpush1.msra.mxu0 0.0
    %1829 = vmatprep.subr.mxu0 0.0
    %1830 = vmatpush1.msra.mxu0 0.0
    %1831 = vmatprep.subr.mxu0 0.0
    %1832 = vmatpush1.msra.mxu0 0.0
    %1833 = vmatprep.subr.mxu0 0.0
    %1834 = vmatpush1.msra.mxu0 0.0
    %1835 = vmatprep.subr.mxu0 0.0
    %1836 = vmatpush1.msra.mxu0 0.0
    %1837 = vmatprep.subr.mxu0 0.0
    %1838 = vmatpush1.msra.mxu0 0.0
    %1839 = vmatprep.subr.mxu0 0.0
    %1840 = vmatpush1.msra.mxu0 0.0
    %1841 = vmatprep.subr.mxu0 0.0
    %1842 = vmatpush1.msra.mxu0 0.0
    %1843 = vmatprep.subr.mxu0 0.0
    %1844 = vmatpush1.msra.mxu0 0.0
    %1845 = vmatprep.subr.mxu0 0.0
    %1846 = vmatpush1.msra.mxu0 0.0
    %1847 = vmatprep.subr.mxu0 0.0
    %1848 = vmatpush1.msra.mxu0 0.0
    %1849 = vmatprep.subr.mxu0 0.0
    %1850 = vmatpush1.msra.mxu0 0.0
    %1851 = vmatprep.subr.mxu0 0.0
    %1852 = vmatpush1.msra.mxu0 0.0
    %1853 = vmatprep.subr.mxu0 0.0
    %1854 = vmatpush1.msra.mxu0 0.0
    %1855 = vmatprep.subr.mxu0 0.0
    %1856 = vmatpush1.msra.mxu0 0.0
    %1857 = vmatprep.subr.mxu0 0.0
    %1858 = vmatpush1.msra.mxu0 0.0
    %1859 = vmatprep.subr.mxu0 0.0
    %1860 = vmatpush1.msra.mxu0 0.0
    %1861 = vmatprep.mubr.f32.mxu0 0.0
    %1862 = vmatmul.mubr.f32.gmra.mrb[0].mxu0 %v1795
    %v1863 = vpop.f32.mrb[0].mxu0
    %v1864 = vadd.f32 0.0, %v1863
    %v1865 = vpop.f32.mrb[0].mxu0
    %1866 = vdwg.mxu0
    %v1868 = vrot.slane %v1864, 2
    %v1869 = vrot.slane %v1864, 3
    %v1872 = vadd.f32 %v119, %v1868
    %v1873 = vadd.f32 %v125, %v1869
    %v1876 = vrot.slane %v1786, 2
    %v1877 = vrot.slane %v1787, 1
    %v1878 = vsel %vm393, %v1877, %v1876
    %1879 = vrot.lane.b32.xlu0 %v1878, 64
    %v1880 = vpop.permute.xlu0 %1879
    %v1881 = vsel %vm137, %v1880, 0
    %1883 = vmatprep.subr.mxu0 0.0
    %1884 = vmatpush1.msra.mxu0 %v133
    %1885 = vmatprep.subr.mxu0 0.0
    %1886 = vmatpush1.msra.mxu0 %v134
    %1887 = vmatprep.subr.mxu0 0.0
    %1888 = vmatpush1.msra.mxu0 %v135
    %1889 = vmatprep.subr.mxu0 0.0
    %1890 = vmatpush1.msra.mxu0 %v136
    %1891 = vmatprep.subr.mxu0 0.0
    %1892 = vmatpush1.msra.mxu0 0.0
    %1893 = vmatprep.subr.mxu0 0.0
    %1894 = vmatpush1.msra.mxu0 0.0
    %1895 = vmatprep.subr.mxu0 0.0
    %1896 = vmatpush1.msra.mxu0 0.0
    %1897 = vmatprep.subr.mxu0 0.0
    %1898 = vmatpush1.msra.mxu0 0.0
    %1899 = vmatprep.subr.mxu0 0.0
    %1900 = vmatpush1.msra.mxu0 0.0
    %1901 = vmatprep.subr.mxu0 0.0
    %1902 = vmatpush1.msra.mxu0 0.0
    %1903 = vmatprep.subr.mxu0 0.0
    %1904 = vmatpush1.msra.mxu0 0.0
    %1905 = vmatprep.subr.mxu0 0.0
    %1906 = vmatpush1.msra.mxu0 0.0
    %1907 = vmatprep.subr.mxu0 0.0
    %1908 = vmatpush1.msra.mxu0 0.0
    %1909 = vmatprep.subr.mxu0 0.0
    %1910 = vmatpush1.msra.mxu0 0.0
    %1911 = vmatprep.subr.mxu0 0.0
    %1912 = vmatpush1.msra.mxu0 0.0
    %1913 = vmatprep.subr.mxu0 0.0
    %1914 = vmatpush1.msra.mxu0 0.0
    %1915 = vmatprep.subr.mxu0 0.0
    %1916 = vmatpush1.msra.mxu0 0.0
    %1917 = vmatprep.subr.mxu0 0.0
    %1918 = vmatpush1.msra.mxu0 0.0
    %1919 = vmatprep.subr.mxu0 0.0
    %1920 = vmatpush1.msra.mxu0 0.0
    %1921 = vmatprep.subr.mxu0 0.0
    %1922 = vmatpush1.msra.mxu0 0.0
    %1923 = vmatprep.subr.mxu0 0.0
    %1924 = vmatpush1.msra.mxu0 0.0
    %1925 = vmatprep.subr.mxu0 0.0
    %1926 = vmatpush1.msra.mxu0 0.0
    %1927 = vmatprep.subr.mxu0 0.0
    %1928 = vmatpush1.msra.mxu0 0.0
    %1929 = vmatprep.subr.mxu0 0.0
    %1930 = vmatpush1.msra.mxu0 0.0
    %1931 = vmatprep.subr.mxu0 0.0
    %1932 = vmatpush1.msra.mxu0 0.0
    %1933 = vmatprep.subr.mxu0 0.0
    %1934 = vmatpush1.msra.mxu0 0.0
    %1935 = vmatprep.subr.mxu0 0.0
    %1936 = vmatpush1.msra.mxu0 0.0
    %1937 = vmatprep.subr.mxu0 0.0
    %1938 = vmatpush1.msra.mxu0 0.0
    %1939 = vmatprep.subr.mxu0 0.0
    %1940 = vmatpush1.msra.mxu0 0.0
    %1941 = vmatprep.subr.mxu0 0.0
    %1942 = vmatpush1.msra.mxu0 0.0
    %1943 = vmatprep.subr.mxu0 0.0
    %1944 = vmatpush1.msra.mxu0 0.0
    %1945 = vmatprep.subr.mxu0 0.0
    %1946 = vmatpush1.msra.mxu0 0.0
    %1947 = vmatprep.mubr.f32.mxu0 0.0
    %1948 = vmatmul.mubr.f32.gmra.mrb[0].mxu0 %v1881
    %v1949 = vpop.f32.mrb[0].mxu0
    %v1950 = vadd.f32 0.0, %v1949
    %v1951 = vpop.f32.mrb[0].mxu0
    %1952 = vdwg.mxu0
    %v1954 = vrot.slane %v1950, 7
    %v1957 = vadd.f32 %v121, %v1954
    %v1958 = vadd.f32 %v127, %v1950
    %v1959 = vxor.u32 %v1872, 2147483648
    %v1960 = vxor.u32 %v1873, 2147483648
    %v1961 = vmul.f32 %v1959, 1.442695
    %v1962 = vpow.pop %v1961
    %v1963 = vmul.f32 %v1960, 1.442695
    %v1964 = vpow.pop %v1963
    %v1965 = vadd.f32 %v1962, 1.0
    %v1966 = vadd.f32 %v1964, 1.0
    %v1967 = vrcp.pop %v1965
    %v1968 = vmul.f32 1.0, %v1967
    %v1969 = vrcp.pop %v1966
    %v1970 = vmul.f32 1.0, %v1969
    %v1971 = vtanh.pop %v1872
    %v1972 = vtanh.pop %v1873
    %v1975 = vrot.slane %v1720, 7
    %v1976 = vrot.slane %v1721, 7
    %v1979 = vmul.f32 %v1968, %v1975
    %v1980 = vmul.f32 %v1970, %v1976
    %1983 = vrot.lane.b32.xlu0 %v1971, 32
    %v1984 = vpop.permute.xlu0 %1983
    %1985 = vrot.lane.b32.xlu0 %v1972, 32
    %v1986 = vpop.permute.xlu0 %1985
    %v1989 = vmul.f32 %v1968, %v1984
    %v1990 = vmul.f32 %v1970, %v1986
    %1993 = vrot.lane.b32.xlu0 %v1989, 32
    %v1994 = vpop.permute.xlu0 %1993
    %1995 = vrot.lane.b32.xlu0 %v1990, 32
    %v1996 = vpop.permute.xlu0 %1995
    %v1999 = vadd.f32 %v1979, %v1994
    %v2000 = vadd.f32 %v1980, %v1996
    %v2001 = vtanh.pop %v1999
    %v2002 = vtanh.pop %v2000
    %2005 = vrot.lane.b32.xlu0 %v2001, 32
    %v2006 = vpop.permute.xlu0 %2005
    %2007 = vrot.lane.b32.xlu0 %v2002, 32
    %v2008 = vpop.permute.xlu0 %2007
    %v2011 = vmul.f32 %v1968, %v2006
    %v2012 = vmul.f32 %v1970, %v2008
    %v2013 = vxor.u32 %v1957, 2147483648
    %v2014 = vxor.u32 %v1958, 2147483648
    %v2015 = vmul.f32 %v2013, 1.442695
    %v2016 = vpow.pop %v2015
    %v2017 = vmul.f32 %v2014, 1.442695
    %v2018 = vpow.pop %v2017
    %v2019 = vadd.f32 %v2016, 1.0
    %v2020 = vadd.f32 %v2018, 1.0
    %v2021 = vrcp.pop %v2019
    %v2022 = vmul.f32 1.0, %v2021
    %v2023 = vrcp.pop %v2020
    %v2024 = vmul.f32 1.0, %v2023
    %v2025 = vtanh.pop %v1957
    %v2026 = vtanh.pop %v1958
    %v2029 = vrot.slane %v1774, 1
    %v2030 = vrot.slane %v1775, 1
    %v2033 = vmul.f32 %v2022, %v2029
    %v2034 = vmul.f32 %v2024, %v2030
    %2037 = vrot.lane.b32.xlu0 %v2025, 32
    %v2038 = vpop.permute.xlu0 %2037
    %2039 = vrot.lane.b32.xlu0 %v2026, 32
    %v2040 = vpop.permute.xlu0 %2039
    %v2043 = vmul.f32 %v2022, %v2038
    %v2044 = vmul.f32 %v2024, %v2040
    %2047 = vrot.lane.b32.xlu0 %v2043, 32
    %v2048 = vpop.permute.xlu0 %2047
    %2049 = vrot.lane.b32.xlu0 %v2044, 32
    %v2050 = vpop.permute.xlu0 %2049
    %v2053 = vadd.f32 %v2033, %v2048
    %v2054 = vadd.f32 %v2034, %v2050
    %v2055 = vtanh.pop %v2053
    %v2056 = vtanh.pop %v2054
    %2059 = vrot.lane.b32.xlu0 %v2055, 32
    %v2060 = vpop.permute.xlu0 %2059
    %2061 = vrot.lane.b32.xlu0 %v2056, 32
    %v2062 = vpop.permute.xlu0 %2061
    %v2065 = vmul.f32 %v2022, %v2060
    %v2066 = vmul.f32 %v2024, %v2062
    %v2069 = vrot.slane %v2011, 6
    %v2070 = vrot.slane %v2012, 5
    %v2071 = vsel %vm393, %v2070, %v2069
    %2072 = vrot.lane.b32.xlu0 %v2071, 64
    %v2073 = vpop.permute.xlu0 %2072
    %v2074 = vsel %vm137, %v2073, 0
    %2076 = vmatprep.subr.mxu0 0.0
    %2077 = vmatpush1.msra.mxu0 %v129
    %2078 = vmatprep.subr.mxu0 0.0
    %2079 = vmatpush1.msra.mxu0 %v130
    %2080 = vmatprep.subr.mxu0 0.0
    %2081 = vmatpush1.msra.mxu0 %v131
    %2082 = vmatprep.subr.mxu0 0.0
    %2083 = vmatpush1.msra.mxu0 %v132
    %2084 = vmatprep.subr.mxu0 0.0
    %2085 = vmatpush1.msra.mxu0 0.0
    %2086 = vmatprep.subr.mxu0 0.0
    %2087 = vmatpush1.msra.mxu0 0.0
    %2088 = vmatprep.subr.mxu0 0.0
    %2089 = vmatpush1.msra.mxu0 0.0
    %2090 = vmatprep.subr.mxu0 0.0
    %2091 = vmatpush1.msra.mxu0 0.0
    %2092 = vmatprep.subr.mxu0 0.0
    %2093 = vmatpush1.msra.mxu0 0.0
    %2094 = vmatprep.subr.mxu0 0.0
    %2095 = vmatpush1.msra.mxu0 0.0
    %2096 = vmatprep.subr.mxu0 0.0
    %2097 = vmatpush1.msra.mxu0 0.0
    %2098 = vmatprep.subr.mxu0 0.0
    %2099 = vmatpush1.msra.mxu0 0.0
    %2100 = vmatprep.subr.mxu0 0.0
    %2101 = vmatpush1.msra.mxu0 0.0
    %2102 = vmatprep.subr.mxu0 0.0
    %2103 = vmatpush1.msra.mxu0 0.0
    %2104 = vmatprep.subr.mxu0 0.0
    %2105 = vmatpush1.msra.mxu0 0.0
    %2106 = vmatprep.subr.mxu0 0.0
    %2107 = vmatpush1.msra.mxu0 0.0
    %2108 = vmatprep.subr.mxu0 0.0
    %2109 = vmatpush1.msra.mxu0 0.0
    %2110 = vmatprep.subr.mxu0 0.0
    %2111 = vmatpush1.msra.mxu0 0.0
    %2112 = vmatprep.subr.mxu0 0.0
    %2113 = vmatpush1.msra.mxu0 0.0
    %2114 = vmatprep.subr.mxu0 0.0
    %2115 = vmatpush1.msra.mxu0 0.0
    %2116 = vmatprep.subr.mxu0 0.0
    %2117 = vmatpush1.msra.mxu0 0.0
    %2118 = vmatprep.subr.mxu0 0.0
    %2119 = vmatpush1.msra.mxu0 0.0
    %2120 = vmatprep.subr.mxu0 0.0
    %2121 = vmatpush1.msra.mxu0 0.0
    %2122 = vmatprep.subr.mxu0 0.0
    %2123 = vmatpush1.msra.mxu0 0.0
    %2124 = vmatprep.subr.mxu0 0.0
    %2125 = vmatpush1.msra.mxu0 0.0
    %2126 = vmatprep.subr.mxu0 0.0
    %2127 = vmatpush1.msra.mxu0 0.0
    %2128 = vmatprep.subr.mxu0 0.0
    %2129 = vmatpush1.msra.mxu0 0.0
    %2130 = vmatprep.subr.mxu0 0.0
    %2131 = vmatpush1.msra.mxu0 0.0
    %2132 = vmatprep.subr.mxu0 0.0
    %2133 = vmatpush1.msra.mxu0 0.0
    %2134 = vmatprep.subr.mxu0 0.0
    %2135 = vmatpush1.msra.mxu0 0.0
    %2136 = vmatprep.subr.mxu0 0.0
    %2137 = vmatpush1.msra.mxu0 0.0
    %2138 = vmatprep.subr.mxu0 0.0
    %2139 = vmatpush1.msra.mxu0 0.0
    %2140 = vmatprep.mubr.f32.mxu0 0.0
    %2141 = vmatmul.mubr.f32.gmra.mrb[0].mxu0 %v2074
    %v2142 = vpop.f32.mrb[0].mxu0
    %v2143 = vadd.f32 0.0, %v2142
    %v2144 = vpop.f32.mrb[0].mxu0
    %2145 = vdwg.mxu0
    %v2147 = vrot.slane %v2143, 1
    %v2148 = vrot.slane %v2143, 2
    %v2151 = vadd.f32 %v119, %v2147
    %v2152 = vadd.f32 %v125, %v2148
    %v2155 = vrot.slane %v2065, 1
    %v2156 = vsel %vm393, %v2066, %v2155
    %2157 = vrot.lane.b32.xlu0 %v2156, 64
    %v2158 = vpop.permute.xlu0 %2157
    %v2159 = vsel %vm137, %v2158, 0
    %2161 = vmatprep.subr.mxu0 0.0
    %2162 = vmatpush1.msra.mxu0 %v133
    %2163 = vmatprep.subr.mxu0 0.0
    %2164 = vmatpush1.msra.mxu0 %v134
    %2165 = vmatprep.subr.mxu0 0.0
    %2166 = vmatpush1.msra.mxu0 %v135
    %2167 = vmatprep.subr.mxu0 0.0
    %2168 = vmatpush1.msra.mxu0 %v136
    %2169 = vmatprep.subr.mxu0 0.0
    %2170 = vmatpush1.msra.mxu0 0.0
    %2171 = vmatprep.subr.mxu0 0.0
    %2172 = vmatpush1.msra.mxu0 0.0
    %2173 = vmatprep.subr.mxu0 0.0
    %2174 = vmatpush1.msra.mxu0 0.0
    %2175 = vmatprep.subr.mxu0 0.0
    %2176 = vmatpush1.msra.mxu0 0.0
    %2177 = vmatprep.subr.mxu0 0.0
    %2178 = vmatpush1.msra.mxu0 0.0
    %2179 = vmatprep.subr.mxu0 0.0
    %2180 = vmatpush1.msra.mxu0 0.0
    %2181 = vmatprep.subr.mxu0 0.0
    %2182 = vmatpush1.msra.mxu0 0.0
    %2183 = vmatprep.subr.mxu0 0.0
    %2184 = vmatpush1.msra.mxu0 0.0
    %2185 = vmatprep.subr.mxu0 0.0
    %2186 = vmatpush1.msra.mxu0 0.0
    %2187 = vmatprep.subr.mxu0 0.0
    %2188 = vmatpush1.msra.mxu0 0.0
    %2189 = vmatprep.subr.mxu0 0.0
    %2190 = vmatpush1.msra.mxu0 0.0
    %2191 = vmatprep.subr.mxu0 0.0
    %2192 = vmatpush1.msra.mxu0 0.0
    %2193 = vmatprep.subr.mxu0 0.0
    %2194 = vmatpush1.msra.mxu0 0.0
    %2195 = vmatprep.subr.mxu0 0.0
    %2196 = vmatpush1.msra.mxu0 0.0
    %2197 = vmatprep.subr.mxu0 0.0
    %2198 = vmatpush1.msra.mxu0 0.0
    %2199 = vmatprep.subr.mxu0 0.0
    %2200 = vmatpush1.msra.mxu0 0.0
    %2201 = vmatprep.subr.mxu0 0.0
    %2202 = vmatpush1.msra.mxu0 0.0
    %2203 = vmatprep.subr.mxu0 0.0
    %2204 = vmatpush1.msra.mxu0 0.0
    %2205 = vmatprep.subr.mxu0 0.0
    %2206 = vmatpush1.msra.mxu0 0.0
    %2207 = vmatprep.subr.mxu0 0.0
    %2208 = vmatpush1.msra.mxu0 0.0
    %2209 = vmatprep.subr.mxu0 0.0
    %2210 = vmatpush1.msra.mxu0 0.0
    %2211 = vmatprep.subr.mxu0 0.0
    %2212 = vmatpush1.msra.mxu0 0.0
    %2213 = vmatprep.subr.mxu0 0.0
    %2214 = vmatpush1.msra.mxu0 0.0
    %2215 = vmatprep.subr.mxu0 0.0
    %2216 = vmatpush1.msra.mxu0 0.0
    %2217 = vmatprep.subr.mxu0 0.0
    %2218 = vmatpush1.msra.mxu0 0.0
    %2219 = vmatprep.subr.mxu0 0.0
    %2220 = vmatpush1.msra.mxu0 0.0
    %2221 = vmatprep.subr.mxu0 0.0
    %2222 = vmatpush1.msra.mxu0 0.0
    %2223 = vmatprep.subr.mxu0 0.0
    %2224 = vmatpush1.msra.mxu0 0.0
    %2225 = vmatprep.mubr.f32.mxu0 0.0
    %2226 = vmatmul.mubr.f32.gmra.mrb[0].mxu0 %v2159
    %v2227 = vpop.f32.mrb[0].mxu0
    %v2228 = vadd.f32 0.0, %v2227
    %v2229 = vpop.f32.mrb[0].mxu0
    %2230 = vdwg.mxu0
    %v2232 = vrot.slane %v2228, 1
    %v2235 = vadd.f32 %v121, %v2228
    %v2236 = vadd.f32 %v127, %v2232
    %v2237 = vxor.u32 %v2151, 2147483648
    %v2238 = vxor.u32 %v2152, 2147483648
    %v2239 = vmul.f32 %v2237, 1.442695
    %v2240 = vpow.pop %v2239
    %v2241 = vmul.f32 %v2238, 1.442695
    %v2242 = vpow.pop %v2241
    %v2243 = vadd.f32 %v2240, 1.0
    %v2244 = vadd.f32 %v2242, 1.0
    %v2245 = vrcp.pop %v2243
    %v2246 = vmul.f32 1.0, %v2245
    %v2247 = vrcp.pop %v2244
    %v2248 = vmul.f32 1.0, %v2247
    %v2249 = vtanh.pop %v2151
    %v2250 = vtanh.pop %v2152
    %v2253 = vrot.slane %v1999, 7
    %v2254 = vrot.slane %v2000, 7
    %v2257 = vmul.f32 %v2246, %v2253
    %v2258 = vmul.f32 %v2248, %v2254
    %2261 = vrot.lane.b32.xlu0 %v2249, 32
    %v2262 = vpop.permute.xlu0 %2261
    %2263 = vrot.lane.b32.xlu0 %v2250, 32
    %v2264 = vpop.permute.xlu0 %2263
    %v2267 = vmul.f32 %v2246, %v2262
    %v2268 = vmul.f32 %v2248, %v2264
    %2271 = vrot.lane.b32.xlu0 %v2267, 32
    %v2272 = vpop.permute.xlu0 %2271
    %2273 = vrot.lane.b32.xlu0 %v2268, 32
    %v2274 = vpop.permute.xlu0 %2273
    %v2277 = vadd.f32 %v2257, %v2272
    %v2278 = vadd.f32 %v2258, %v2274
    %v2279 = vtanh.pop %v2277
    %v2280 = vtanh.pop %v2278
    %2283 = vrot.lane.b32.xlu0 %v2279, 32
    %v2284 = vpop.permute.xlu0 %2283
    %2285 = vrot.lane.b32.xlu0 %v2280, 32
    %v2286 = vpop.permute.xlu0 %2285
    %v2289 = vmul.f32 %v2246, %v2284
    %v2290 = vmul.f32 %v2248, %v2286
    %v2291 = vxor.u32 %v2235, 2147483648
    %v2292 = vxor.u32 %v2236, 2147483648
    %v2293 = vmul.f32 %v2291, 1.442695
    %v2294 = vpow.pop %v2293
    %v2295 = vmul.f32 %v2292, 1.442695
    %v2296 = vpow.pop %v2295
    %v2297 = vadd.f32 %v2294, 1.0
    %v2298 = vadd.f32 %v2296, 1.0
    %v2299 = vrcp.pop %v2297
    %v2300 = vmul.f32 1.0, %v2299
    %v2301 = vrcp.pop %v2298
    %v2302 = vmul.f32 1.0, %v2301
    %v2303 = vtanh.pop %v2235
    %v2304 = vtanh.pop %v2236
    %v2307 = vrot.slane %v2053, 1
    %v2308 = vrot.slane %v2054, 1
    %v2311 = vmul.f32 %v2300, %v2307
    %v2312 = vmul.f32 %v2302, %v2308
    %2315 = vrot.lane.b32.xlu0 %v2303, 32
    %v2316 = vpop.permute.xlu0 %2315
    %2317 = vrot.lane.b32.xlu0 %v2304, 32
    %v2318 = vpop.permute.xlu0 %2317
    %v2321 = vmul.f32 %v2300, %v2316
    %v2322 = vmul.f32 %v2302, %v2318
    %2325 = vrot.lane.b32.xlu0 %v2321, 32
    %v2326 = vpop.permute.xlu0 %2325
    %2327 = vrot.lane.b32.xlu0 %v2322, 32
    %v2328 = vpop.permute.xlu0 %2327
    %v2331 = vadd.f32 %v2311, %v2326
    %v2332 = vadd.f32 %v2312, %v2328
    %v2333 = vtanh.pop %v2331
    %v2334 = vtanh.pop %v2332
    %2337 = vrot.lane.b32.xlu0 %v2333, 32
    %v2338 = vpop.permute.xlu0 %2337
    %2339 = vrot.lane.b32.xlu0 %v2334, 32
    %v2340 = vpop.permute.xlu0 %2339
    %v2343 = vmul.f32 %v2300, %v2338
    %v2344 = vmul.f32 %v2302, %v2340
    %v2347 = vrot.slane %v2290, 7
    %2348 = vrot.lane.b32.xlu0 %v2289, 64
    %v2349 = vpop.permute.xlu0 %2348
    %2350 = vrot.lane.b32.xlu0 %v2347, 64
    %v2351 = vpop.permute.xlu0 %2350
    %v2356 = vrot.slane %v2343, 1
    %2357 = vrot.lane.b32.xlu0 %v2356, 96
    %v2358 = vpop.permute.xlu0 %2357
    %2359 = vrot.lane.b32.xlu0 %v2344, 96
    %v2360 = vpop.permute.xlu0 %2359
    %v2365 = vrot.slane %v2278, 7
    %2366 = vrot.lane.b32.xlu0 %v2277, 32
    %v2367 = vpop.permute.xlu0 %2366
    %2368 = vrot.lane.b32.xlu0 %v2365, 32
    %v2369 = vpop.permute.xlu0 %2368
    %v2374 = vrot.slane %v2331, 1
    %2375 = vrot.lane.b32.xlu0 %v2374, 64
    %v2376 = vpop.permute.xlu0 %2375
    %2377 = vrot.lane.b32.xlu0 %v2332, 64
    %v2378 = vpop.permute.xlu0 %2377
    %v2381 = vsel %vm137, %v2349, %v2358
    %v2382 = vsel %vm137, %v2351, %v2360
    %vm2383 = vcmask 523264
    %v2384 = vsel %vm2383, %v2381, %v2367
    %v2385 = vsel %vm2383, %v2382, %v2369
    %vm2386 = vcmask 785408
    %v2387 = vsel %vm2386, %v2384, %v2376
    %v2388 = vsel %vm2386, %v2385, %v2378
    %v2389 = vld [vmem:[%s5] sm:$0xff]
    %v2390 = vld [vmem:[%s5 + $0x8] sm:$0xff]
    %v2391 = vld [vmem:[%s5 + $0x10] sm:$0xff]
    %v2392 = vld [vmem:[%s5 + $0x18] sm:$0xff]
    %v2393 = vld [vmem:[%s5 + $0x20] sm:$0xff]
    %v2394 = vld [vmem:[%s5 + $0x28] sm:$0xff]
    %v2395 = vld [vmem:[%s5 + $0x30] sm:$0xff]
    %v2396 = vld [vmem:[%s5 + $0x38] sm:$0xff]
    %v2397 = vld [vmem:[%s5 + $0x40] sm:$0xff]
    %v2398 = vld [vmem:[%s5 + $0x48] sm:$0xff]
    %v2399 = vld [vmem:[%s5 + $0x50] sm:$0xff]
    %v2400 = vld [vmem:[%s5 + $0x58] sm:$0xff]
    %v2401 = vld [vmem:[%s5 + $0x60] sm:$0xff]
    %v2402 = vld [vmem:[%s5 + $0x68] sm:$0xff]
    %v2403 = vld [vmem:[%s5 + $0x70] sm:$0xff]
    %v2404 = vld [vmem:[%s5 + $0x78] sm:$0xff]
    %v2405 = vld [vmem:[%s6] sm:$0x1]
    %v2407 = vlaneseq
    %v2408 = vshrl.u32 %v2407, 7
    %v2409 = vsub.s32 0, %v2408
    %v2410 = vrot.slane %v2405, %v2409
    %vm2414 = vcmask 1040384
    %v2415 = vrot.slane %v2387, 7
    %v2416 = vrot.slane %v2388, 7
    %v2417 = vsel %vm2414, %v2415, %v2416
    %2419 = vmatprep.subr.mxu0 0.0
    %2420 = vmatpush1.msra.mxu0 %v2389
    %2421 = vmatprep.subr.mxu0 0.0
    %2422 = vmatpush1.msra.mxu0 %v2390
    %2423 = vmatprep.subr.mxu0 0.0
    %2424 = vmatpush1.msra.mxu0 %v2391
    %2425 = vmatprep.subr.mxu0 0.0
    %2426 = vmatpush1.msra.mxu0 %v2392
    %2427 = vmatprep.subr.mxu0 0.0
    %2428 = vmatpush1.msra.mxu0 %v2393
    %2429 = vmatprep.subr.mxu0 0.0
    %2430 = vmatpush1.msra.mxu0 %v2394
    %2431 = vmatprep.subr.mxu0 0.0
    %2432 = vmatpush1.msra.mxu0 %v2395
    %2433 = vmatprep.subr.mxu0 0.0
    %2434 = vmatpush1.msra.mxu0 %v2396
    %2435 = vmatprep.subr.mxu0 0.0
    %2436 = vmatpush1.msra.mxu0 %v2397
    %2437 = vmatprep.subr.mxu0 0.0
    %2438 = vmatpush1.msra.mxu0 %v2398
    %2439 = vmatprep.subr.mxu0 0.0
    %2440 = vmatpush1.msra.mxu0 %v2399
    %2441 = vmatprep.subr.mxu0 0.0
    %2442 = vmatpush1.msra.mxu0 %v2400
    %2443 = vmatprep.subr.mxu0 0.0
    %2444 = vmatpush1.msra.mxu0 %v2401
    %2445 = vmatprep.subr.mxu0 0.0
    %2446 = vmatpush1.msra.mxu0 %v2402
    %2447 = vmatprep.subr.mxu0 0.0
    %2448 = vmatpush1.msra.mxu0 %v2403
    %2449 = vmatprep.subr.mxu0 0.0
    %2450 = vmatpush1.msra.mxu0 %v2404
    %2451 = vmatprep.subr.mxu0 0.0
    %2452 = vmatpush1.msra.mxu0 0.0
    %2453 = vmatprep.subr.mxu0 0.0
    %2454 = vmatpush1.msra.mxu0 0.0
    %2455 = vmatprep.subr.mxu0 0.0
    %2456 = vmatpush1.msra.mxu0 0.0
    %2457 = vmatprep.subr.mxu0 0.0
    %2458 = vmatpush1.msra.mxu0 0.0
    %2459 = vmatprep.subr.mxu0 0.0
    %2460 = vmatpush1.msra.mxu0 0.0
    %2461 = vmatprep.subr.mxu0 0.0
    %2462 = vmatpush1.msra.mxu0 0.0
    %2463 = vmatprep.subr.mxu0 0.0
    %2464 = vmatpush1.msra.mxu0 0.0
    %2465 = vmatprep.subr.mxu0 0.0
    %2466 = vmatpush1.msra.mxu0 0.0
    %2467 = vmatprep.subr.mxu0 0.0
    %2468 = vmatpush1.msra.mxu0 0.0
    %2469 = vmatprep.subr.mxu0 0.0
    %2470 = vmatpush1.msra.mxu0 0.0
    %2471 = vmatprep.subr.mxu0 0.0
    %2472 = vmatpush1.msra.mxu0 0.0
    %2473 = vmatprep.subr.mxu0 0.0
    %2474 = vmatpush1.msra.mxu0 0.0
    %2475 = vmatprep.subr.mxu0 0.0
    %2476 = vmatpush1.msra.mxu0 0.0
    %2477 = vmatprep.subr.mxu0 0.0
    %2478 = vmatpush1.msra.mxu0 0.0
    %2479 = vmatprep.subr.mxu0 0.0
    %2480 = vmatpush1.msra.mxu0 0.0
    %2481 = vmatprep.subr.mxu0 0.0
    %2482 = vmatpush1.msra.mxu0 0.0
    %2483 = vmatprep.mubr.f32.mxu0 0.0
    %2484 = vmatmul.mubr.f32.gmra.mrb[0].mxu0 %v2417
    %v2485 = vpop.f32.mrb[0].mxu0
    %v2486 = vadd.f32 %v2410, %v2485
    %v2487 = vpop.f32.mrb[0].mxu0
    %2488 = vdwg.mxu0
    %vm2489 = vcmask 9216
    %2490 = vst.msk [vmem:[#allocation2] sm:$0x3] %vm2489, %v2486
    // Predicated region
    $region30: #{tpu_custom_call.1} parent=1 // pred_check
      _
    $region31: #{tpu_custom_call.1} parent=1 // pred_check_branch
      %2492 = sbr.rel (0) target = $region33
    $region32: #{tpu_custom_call.1} parent=1 // pred_region
      %s2494 = ssub.s32 32, 32
      %2495 = vsyncadd [#allocation3], %s2494
      %s2497 = sshll.u32 [#allocation2], 4
      %s2498 = int_to_ptr.vmem [resolvable:$true] %s2497
      %2500 = dma.vmem_to_hbm [thread:$0]  %s2498, 32, %s7, [#allocation3]
    $region33: #{tpu_custom_call.1} parent=1 // pred_fallthru
      _
    // Predicated region
    $region34: #{tpu_custom_call.1} parent=1 // pred_check
      _
    $region35: #{tpu_custom_call.1} parent=1 // pred_check_branch
      %2502 = sbr.rel (0) target = $region37
    $region36: #{tpu_custom_call.1} parent=1 // pred_region
      %2503 = dma.done [#allocation3], 32
    $region37: #{tpu_custom_call.1} parent=1 // pred_fallthru
      _
    %2504 = vsyncpa [#allocation3], 1

</llo_original>
